<compile_context>
chip_gen: v6e
topology: v6e:2x2x1
jax: 0.10.0
libtpu: 0.0.40
codegen_flags: <defaults>
</compile_context>

<pallas_src>
import functools
import math

import jax
import jax.numpy as jnp
from jax.experimental import pallas as pl
from jax.experimental.pallas import tpu as pltpu


def _round_up(n, m):
    return max(m, -(-n // m) * m)


# ----------------------------------------------------------------------------
# Pallas kernel
# ----------------------------------------------------------------------------
def _gru_nilm_kernel(x_ref, p_ref, fcw_ref, o_ref, *, seq_len, batch_pad, input_size):
    f32 = jnp.float32
    Bp = batch_pad
    I = input_size
    S = seq_len

    # ---- unpack the 3*I + 21 recurrence scalars from SMEM ------------------
    base = 3 * I
    b_ir0, b_iz0, b_in0 = p_ref[base + 0], p_ref[base + 1], p_ref[base + 2]
    w_hr0, w_hz0, w_hn0 = p_ref[base + 3], p_ref[base + 4], p_ref[base + 5]
    b_hr0, b_hz0, b_hn0 = p_ref[base + 6], p_ref[base + 7], p_ref[base + 8]
    w_ir1, w_iz1, w_in1 = p_ref[base + 9], p_ref[base + 10], p_ref[base + 11]
    b_ir1, b_iz1, b_in1 = p_ref[base + 12], p_ref[base + 13], p_ref[base + 14]
    w_hr1, w_hz1, w_hn1 = p_ref[base + 15], p_ref[base + 16], p_ref[base + 17]
    b_hr1, b_hz1, b_hn1 = p_ref[base + 18], p_ref[base + 19], p_ref[base + 20]

    # ---- layer-0 input projection: pure VPU broadcast FMAs (no MXU) --------
    # Lane extracts of x and the per-gate bias adds are hoisted before the
    # recurrence loop, so no lane-offset slices appear in the loop body.
    x_all = x_ref[...]                                  # (S*Bp, I)
    i_r = jnp.zeros((S * Bp, 1), f32)
    i_z = jnp.zeros((S * Bp, 1), f32)
    i_n = jnp.zeros((S * Bp, 1), f32)
    for k in range(I):
        xk = x_all[:, k:k + 1]                          # (S*Bp, 1)
        i_r = i_r + xk * p_ref[k]                       # w_ir0[k]
        i_z = i_z + xk * p_ref[I + k]                   # w_iz0[k]
        i_n = i_n + xk * p_ref[2 * I + k]               # w_in0[k]
    # Pack r/z pre-activations on 2 lanes -> one EUP push per layer per step.
    i_rz_all = jnp.concatenate([i_r + b_ir0, i_z + b_iz0], axis=1)  # (S*Bp, 2)
    i_n_all = i_n + b_in0                                           # (S*Bp, 1)

    # ---- hoisted 2-lane parameter vectors (r on lane 0, z on lane 1) -------
    def pair(a, b):
        return jnp.concatenate([jnp.full((Bp, 1), a, f32),
                                jnp.full((Bp, 1), b, f32)], axis=1)

    w_hrz0, b_hrz0 = pair(w_hr0, w_hz0), pair(b_hr0, b_hz0)
    w_irz1, b_irz1 = pair(w_ir1, w_iz1), pair(b_ir1, b_iz1)
    w_hrz1, b_hrz1 = pair(w_hr1, w_hz1), pair(b_hr1, b_hz1)

    def sig(u):
        # Single-EUP sigmoid: 0.5*tanh(0.5*u) + 0.5 (avoids exp + reciprocal).
        return 0.5 * jnp.tanh(0.5 * u) + 0.5

    h0 = jnp.zeros((Bp, 1), f32)
    h1 = jnp.zeros((Bp, 1), f32)

    # FC accumulator: last slab of fcw holds the Linear bias (row 0, lanes :B),
    # so the bias is free and the whole FC reduction happens once post-loop.
    acc = fcw_ref[S]                                    # (Bp, LANES)

    # Static unroll: seq_len is small (8).  For seq_len > ~16 switch to
    # lax.fori_loop(..., unroll=True) carrying (h0, h1, acc) to bound vregs.
    for t in range(S):
        lo = t * Bp                                     # aligned sublane block
        i_rz = i_rz_all[lo:lo + Bp, :]                  # (Bp, 2)
        i_nn = i_n_all[lo:lo + Bp, :]                   # (Bp, 1)

        # ---- layer-0 cell: 1 packed sigmoid + 1 tanh, rest VPU FMAs -------
        rz0 = sig(i_rz + h0 * w_hrz0 + b_hrz0)          # (Bp, 2)
        r0 = rz0[:, 0:1]
        z0 = rz0[:, 1:2]                                # off the critical path
        n0 = jnp.tanh(i_nn + r0 * (h0 * w_hn0 + b_hn0))
        h0 = n0 + z0 * (h0 - n0)                        # == (1-z)*n + z*h

        # ---- layer-1 cell (input is h0) ------------------------------------
        rz1 = sig(h0 * w_irz1 + b_irz1 + h1 * w_hrz1 + b_hrz1)
        r1 = rz1[:, 0:1]
        z1 = rz1[:, 1:2]
        n1 = jnp.tanh(h0 * w_in1 + b_in1 + r1 * (h1 * w_hn1 + b_hn1))
        h1 = n1 + z1 * (h1 - n1)

        # Fused Linear: one lane-broadcast FMA into a single-vreg accumulator.
        # Padded rows (b >= B) of fcw_ref are zero, so garbage h1 on padded
        # sublanes never contributes to the output.
        acc = acc + h1 * fcw_ref[t]

    # Single sublane (XLU) reduction + LeakyReLU; lane-dense store.
    y = jnp.sum(acc, axis=0, keepdims=True)             # (1, LANES)
    o_ref[...] = jnp.where(y >= 0.0, y, jnp.float32(0.01) * y)


# ----------------------------------------------------------------------------
# One-time parameter packing (hoisted out of the per-call path)
# ----------------------------------------------------------------------------
def prepare_params(params, *, input_size, hidden_size, batch_size, seq_len):
    assert hidden_size == 1, (
        "GRU_NILM_2.forward requires hidden_size == 1 "
        "(out.view(seq_len * batch_size) only works then).")
    f32 = jnp.float32
    B = batch_size
    Bp = _round_up(B, 8)
    LANES = _round_up(B, 128)

    # All recurrence parameters packed into one SMEM scalar vector.
    scalars = jnp.concatenate([
        jnp.asarray(params["w_ih0"], f32).reshape(-1),   # (3*I,) r|z|n rows
        jnp.asarray(params["b_ih0"], f32).reshape(-1),   # (3,)
        jnp.asarray(params["w_hh0"], f32).reshape(-1),   # (3,)
        jnp.asarray(params["b_hh0"], f32).reshape(-1),   # (3,)
        jnp.asarray(params["w_ih1"], f32).reshape(-1),   # (3,)
        jnp.asarray(params["b_ih1"], f32).reshape(-1),   # (3,)
        jnp.asarray(params["w_hh1"], f32).reshape(-1),   # (3,)
        jnp.asarray(params["b_hh1"], f32).reshape(-1),   # (3,)
    ])
    assert scalars.shape[0] == 3 * input_size + 21

    # Linear weights: (B, S*B) -> per-timestep slabs [t, b, o], flat index =
    # t*B + b (torch .view order), plus one bias slab.  Padded sublanes/lanes
    # are ZERO -- this is the invariant that keeps padded-batch garbage h out
    # of the output.
    fcw = jnp.asarray(params["fc_w"], f32).T.reshape(seq_len, B, B)   # [t, b, o]
    fcw_slabs = jnp.zeros((seq_len + 1, Bp, LANES), f32)
    fcw_slabs = fcw_slabs.at[:seq_len, :B, :B].set(fcw)
    fcw_slabs = fcw_slabs.at[seq_len, 0, :B].set(jnp.asarray(params["fc_b"], f32))

    return jax.device_put(scalars), jax.device_put(fcw_slabs)


# ----------------------------------------------------------------------------
# Per-call wrapper (only x padding + the pallas_call, fused under jit)
# ----------------------------------------------------------------------------
@functools.partial(jax.jit, static_argnames=("input_size", "hidden_size",
                                             "batch_size", "seq_len"))
def gru_nilm_forward(x, scalars, fcw_slabs, *, input_size, hidden_size,
                     batch_size, seq_len):
    assert hidden_size == 1
    f32 = jnp.float32
    B = batch_size
    Bp = _round_up(B, 8)
    LANES = _round_up(B, 128)
    assert x.shape == (seq_len, B, input_size)

    # Only per-call data work: zero-pad batch to a full sublane group and
    # flatten time-major to 2-D (reshape is free).
    xp = jnp.zeros((seq_len, Bp, input_size), f32).at[:, :B, :].set(x.astype(f32))
    x2d = xp.reshape(seq_len * Bp, input_size)

    kernel = functools.partial(_gru_nilm_kernel, seq_len=seq_len,
                               batch_pad=Bp, input_size=input_size)
    vmem = pl.BlockSpec(memory_space=pltpu.MemorySpace.VMEM)
    smem = pl.BlockSpec(memory_space=pltpu.MemorySpace.SMEM)
    out = pl.pallas_call(
        kernel,
        out_shape=jax.ShapeDtypeStruct((1, LANES), f32),
        in_specs=[vmem, smem, vmem],
        out_specs=vmem,
    )(x2d, scalars, fcw_slabs)

    # TODO(synk): if many independent sequences are batched at once, add a
    # leading parallel grid axis over them (exploits the 2nd TC on v7x).
    return out[0, :B].reshape(-1, 1)                 # == out.view(-1, 1) in torch


# ----------------------------------------------------------------------------
# Deterministic parameter init (shapes from nn.GRU / nn.Linear __init__)
# ----------------------------------------------------------------------------
def init_params(key, input_size, hidden_size, batch_size, seq_len):
    bound = 1.0 / math.sqrt(hidden_size)
    ks = jax.random.split(key, 10)

    def u(k, shape, b=bound):
        return jax.random.uniform(k, shape, jnp.float32, -b, b)

    fc_in = batch_size * seq_len
    fc_bound = 1.0 / math.sqrt(fc_in)
    return dict(
        w_ih0=u(ks[0], (3 * hidden_size, input_size)),
        w_hh0=u(ks[1], (3 * hidden_size, hidden_size)),
        b_ih0=u(ks[2], (3 * hidden_size,)),
        b_hh0=u(ks[3], (3 * hidden_size,)),
        w_ih1=u(ks[4], (3 * hidden_size, hidden_size)),
        w_hh1=u(ks[5], (3 * hidden_size, hidden_size)),
        b_ih1=u(ks[6], (3 * hidden_size,)),
        b_hh1=u(ks[7], (3 * hidden_size,)),
        fc_w=u(ks[8], (batch_size, fc_in), fc_bound),
        fc_b=u(ks[9], (batch_size,), fc_bound),
    )


# ----------------------------------------------------------------------------
# Pure-JAX reference (mirrors torch.nn.GRU / Linear / LeakyReLU semantics)
# ----------------------------------------------------------------------------
def reference_forward(x, params, *, hidden_size, batch_size, seq_len):
    hid = hidden_size

    def cell(x_t, h_prev, w_ih, w_hh, b_ih, b_hh):
        gi = x_t @ w_ih.T + b_ih
        gh = h_prev @ w_hh.T + b_hh
        r = jax.nn.sigmoid(gi[:, :hid] + gh[:, :hid])
        z = jax.nn.sigmoid(gi[:, hid:2 * hid] + gh[:, hid:2 * hid])
        n = jnp.tanh(gi[:, 2 * hid:] + r * gh[:, 2 * hid:])
        return (1.0 - z) * n + z * h_prev

    h0 = jnp.zeros((batch_size, hid), jnp.float32)
    h1 = jnp.zeros((batch_size, hid), jnp.float32)
    outs = []
    for t in range(seq_len):
        h0 = cell(x[t], h0, params["w_ih0"], params["w_hh0"],
                  params["b_ih0"], params["b_hh0"])
        h1 = cell(h0, h1, params["w_ih1"], params["w_hh1"],
                  params["b_ih1"], params["b_hh1"])
        outs.append(h1)
    flat = jnp.stack(outs, axis=0).reshape(seq_len * batch_size)
    y = params["fc_w"] @ flat + params["fc_b"]
    y = jnp.where(y >= 0.0, y, 0.01 * y)
    return y.reshape(-1, 1)


if __name__ == "__main__":
    INPUT_SIZE = 4
    HIDDEN_SIZE = 1      # forced by out.view(seq_len * batch_size) in torch code
    BATCH_SIZE = 2
    SEQ_LEN = 8

    key = jax.random.PRNGKey(0)
    kx, kp = jax.random.split(key)
    x = jax.random.normal(kx, (SEQ_LEN, BATCH_SIZE, INPUT_SIZE), jnp.float32)
    params = init_params(kp, INPUT_SIZE, HIDDEN_SIZE, BATCH_SIZE, SEQ_LEN)

    # One-time packing (hoisted out of the per-call path).
    scalars, fcw_slabs = prepare_params(
        params, input_size=INPUT_SIZE, hidden_size=HIDDEN_SIZE,
        batch_size=BATCH_SIZE, seq_len=SEQ_LEN)

    out = gru_nilm_forward(x, scalars, fcw_slabs,
                           input_size=INPUT_SIZE, hidden_size=HIDDEN_SIZE,
                           batch_size=BATCH_SIZE, seq_len=SEQ_LEN)
    out = jax.block_until_ready(out)

    ref = reference_forward(x, params, hidden_size=HIDDEN_SIZE,
                            batch_size=BATCH_SIZE, seq_len=SEQ_LEN)

    assert out.shape == (BATCH_SIZE, 1)
    assert jnp.allclose(out, ref, atol=1e-5, rtol=1e-5), (out, ref)
    print("KERNEL_OK")
</pallas_src>

<mosaic_0001>
module attributes {stable_mosaic.version = 11 : i64} {
  func.func @_gru_nilm_kernel(%arg0: memref<64x4xf32, #tpu.memory_space<vmem>>, %arg1: memref<33xf32, #tpu.memory_space<smem>>, %arg2: memref<9x8x128xf32, #tpu.memory_space<vmem>>, %arg3: memref<1x128xf32, #tpu.memory_space<vmem>>) attributes {dimension_semantics = [], scalar_prefetch = 0 : i64, scratch_operands = 0 : i64, tpu.core_type = #tpu.core_type<tc>} {
    %c12 = arith.constant 12 : index
    %0 = memref.load %arg1[%c12] : memref<33xf32, #tpu.memory_space<smem>>
    %c13 = arith.constant 13 : index
    %1 = memref.load %arg1[%c13] : memref<33xf32, #tpu.memory_space<smem>>
    %c14 = arith.constant 14 : index
    %2 = memref.load %arg1[%c14] : memref<33xf32, #tpu.memory_space<smem>>
    %c15 = arith.constant 15 : index
    %3 = memref.load %arg1[%c15] : memref<33xf32, #tpu.memory_space<smem>>
    %c16 = arith.constant 16 : index
    %4 = memref.load %arg1[%c16] : memref<33xf32, #tpu.memory_space<smem>>
    %c17 = arith.constant 17 : index
    %5 = memref.load %arg1[%c17] : memref<33xf32, #tpu.memory_space<smem>>
    %c18 = arith.constant 18 : index
    %6 = memref.load %arg1[%c18] : memref<33xf32, #tpu.memory_space<smem>>
    %c19 = arith.constant 19 : index
    %7 = memref.load %arg1[%c19] : memref<33xf32, #tpu.memory_space<smem>>
    %c20 = arith.constant 20 : index
    %8 = memref.load %arg1[%c20] : memref<33xf32, #tpu.memory_space<smem>>
    %c21 = arith.constant 21 : index
    %9 = memref.load %arg1[%c21] : memref<33xf32, #tpu.memory_space<smem>>
    %c22 = arith.constant 22 : index
    %10 = memref.load %arg1[%c22] : memref<33xf32, #tpu.memory_space<smem>>
    %c23 = arith.constant 23 : index
    %11 = memref.load %arg1[%c23] : memref<33xf32, #tpu.memory_space<smem>>
    %c24 = arith.constant 24 : index
    %12 = memref.load %arg1[%c24] : memref<33xf32, #tpu.memory_space<smem>>
    %c25 = arith.constant 25 : index
    %13 = memref.load %arg1[%c25] : memref<33xf32, #tpu.memory_space<smem>>
    %c26 = arith.constant 26 : index
    %14 = memref.load %arg1[%c26] : memref<33xf32, #tpu.memory_space<smem>>
    %c27 = arith.constant 27 : index
    %15 = memref.load %arg1[%c27] : memref<33xf32, #tpu.memory_space<smem>>
    %c28 = arith.constant 28 : index
    %16 = memref.load %arg1[%c28] : memref<33xf32, #tpu.memory_space<smem>>
    %c29 = arith.constant 29 : index
    %17 = memref.load %arg1[%c29] : memref<33xf32, #tpu.memory_space<smem>>
    %c30 = arith.constant 30 : index
    %18 = memref.load %arg1[%c30] : memref<33xf32, #tpu.memory_space<smem>>
    %c31 = arith.constant 31 : index
    %19 = memref.load %arg1[%c31] : memref<33xf32, #tpu.memory_space<smem>>
    %c32 = arith.constant 32 : index
    %20 = memref.load %arg1[%c32] : memref<33xf32, #tpu.memory_space<smem>>
    %c0 = arith.constant 0 : index
    %c0_0 = arith.constant 0 : index
    %21 = vector.load %arg0[%c0, %c0_0] : memref<64x4xf32, #tpu.memory_space<vmem>>, vector<64x4xf32>
    %cst = arith.constant 0.000000e+00 : f32
    %22 = vector.broadcast %cst : f32 to vector<64x1xf32>
    %cst_1 = arith.constant 0.000000e+00 : f32
    %23 = vector.broadcast %cst_1 : f32 to vector<64x1xf32>
    %cst_2 = arith.constant 0.000000e+00 : f32
    %24 = vector.broadcast %cst_2 : f32 to vector<64x1xf32>
    %25 = vector.extract_strided_slice %21 {offsets = [0, 0], sizes = [64, 1], strides = [1, 1]} : vector<64x4xf32> to vector<64x1xf32>
    %c0_3 = arith.constant 0 : index
    %26 = memref.load %arg1[%c0_3] : memref<33xf32, #tpu.memory_space<smem>>
    %27 = vector.broadcast %26 : f32 to vector<64x1xf32>
    %28 = arith.mulf %25, %27 : vector<64x1xf32>
    %29 = arith.addf %22, %28 : vector<64x1xf32>
    %c4 = arith.constant 4 : index
    %30 = memref.load %arg1[%c4] : memref<33xf32, #tpu.memory_space<smem>>
    %31 = vector.broadcast %30 : f32 to vector<64x1xf32>
    %32 = arith.mulf %25, %31 : vector<64x1xf32>
    %33 = arith.addf %23, %32 : vector<64x1xf32>
    %c8 = arith.constant 8 : index
    %34 = memref.load %arg1[%c8] : memref<33xf32, #tpu.memory_space<smem>>
    %35 = vector.broadcast %34 : f32 to vector<64x1xf32>
    %36 = arith.mulf %25, %35 : vector<64x1xf32>
    %37 = arith.addf %24, %36 : vector<64x1xf32>
    %38 = vector.extract_strided_slice %21 {offsets = [0, 1], sizes = [64, 1], strides = [1, 1]} : vector<64x4xf32> to vector<64x1xf32>
    %c1 = arith.constant 1 : index
    %39 = memref.load %arg1[%c1] : memref<33xf32, #tpu.memory_space<smem>>
    %40 = vector.broadcast %39 : f32 to vector<64x1xf32>
    %41 = arith.mulf %38, %40 : vector<64x1xf32>
    %42 = arith.addf %29, %41 : vector<64x1xf32>
    %c5 = arith.constant 5 : index
    %43 = memref.load %arg1[%c5] : memref<33xf32, #tpu.memory_space<smem>>
    %44 = vector.broadcast %43 : f32 to vector<64x1xf32>
    %45 = arith.mulf %38, %44 : vector<64x1xf32>
    %46 = arith.addf %33, %45 : vector<64x1xf32>
    %c9 = arith.constant 9 : index
    %47 = memref.load %arg1[%c9] : memref<33xf32, #tpu.memory_space<smem>>
    %48 = vector.broadcast %47 : f32 to vector<64x1xf32>
    %49 = arith.mulf %38, %48 : vector<64x1xf32>
    %50 = arith.addf %37, %49 : vector<64x1xf32>
    %51 = vector.extract_strided_slice %21 {offsets = [0, 2], sizes = [64, 1], strides = [1, 1]} : vector<64x4xf32> to vector<64x1xf32>
    %c2 = arith.constant 2 : index
    %52 = memref.load %arg1[%c2] : memref<33xf32, #tpu.memory_space<smem>>
    %53 = vector.broadcast %52 : f32 to vector<64x1xf32>
    %54 = arith.mulf %51, %53 : vector<64x1xf32>
    %55 = arith.addf %42, %54 : vector<64x1xf32>
    %c6 = arith.constant 6 : index
    %56 = memref.load %arg1[%c6] : memref<33xf32, #tpu.memory_space<smem>>
    %57 = vector.broadcast %56 : f32 to vector<64x1xf32>
    %58 = arith.mulf %51, %57 : vector<64x1xf32>
    %59 = arith.addf %46, %58 : vector<64x1xf32>
    %c10 = arith.constant 10 : index
    %60 = memref.load %arg1[%c10] : memref<33xf32, #tpu.memory_space<smem>>
    %61 = vector.broadcast %60 : f32 to vector<64x1xf32>
    %62 = arith.mulf %51, %61 : vector<64x1xf32>
    %63 = arith.addf %50, %62 : vector<64x1xf32>
    %64 = vector.extract_strided_slice %21 {offsets = [0, 3], sizes = [64, 1], strides = [1, 1]} : vector<64x4xf32> to vector<64x1xf32>
    %c3 = arith.constant 3 : index
    %65 = memref.load %arg1[%c3] : memref<33xf32, #tpu.memory_space<smem>>
    %66 = vector.broadcast %65 : f32 to vector<64x1xf32>
    %67 = arith.mulf %64, %66 : vector<64x1xf32>
    %68 = arith.addf %55, %67 : vector<64x1xf32>
    %c7 = arith.constant 7 : index
    %69 = memref.load %arg1[%c7] : memref<33xf32, #tpu.memory_space<smem>>
    %70 = vector.broadcast %69 : f32 to vector<64x1xf32>
    %71 = arith.mulf %64, %70 : vector<64x1xf32>
    %72 = arith.addf %59, %71 : vector<64x1xf32>
    %c11 = arith.constant 11 : index
    %73 = memref.load %arg1[%c11] : memref<33xf32, #tpu.memory_space<smem>>
    %74 = vector.broadcast %73 : f32 to vector<64x1xf32>
    %75 = arith.mulf %64, %74 : vector<64x1xf32>
    %76 = arith.addf %63, %75 : vector<64x1xf32>
    %77 = vector.broadcast %0 : f32 to vector<64x1xf32>
    %78 = arith.addf %68, %77 : vector<64x1xf32>
    %79 = vector.broadcast %1 : f32 to vector<64x1xf32>
    %80 = arith.addf %72, %79 : vector<64x1xf32>
    %81 = tpu.concatenate %78, %80 in 1 : vector<64x1xf32>, vector<64x1xf32> -> vector<64x2xf32>
    %82 = vector.broadcast %2 : f32 to vector<64x1xf32>
    %83 = arith.addf %76, %82 : vector<64x1xf32>
    %84 = vector.broadcast %3 : f32 to vector<8x1xf32>
    %85 = vector.broadcast %4 : f32 to vector<8x1xf32>
    %86 = tpu.concatenate %84, %85 in 1 : vector<8x1xf32>, vector<8x1xf32> -> vector<8x2xf32>
    %87 = vector.broadcast %6 : f32 to vector<8x1xf32>
    %88 = vector.broadcast %7 : f32 to vector<8x1xf32>
    %89 = tpu.concatenate %87, %88 in 1 : vector<8x1xf32>, vector<8x1xf32> -> vector<8x2xf32>
    %90 = vector.broadcast %9 : f32 to vector<8x1xf32>
    %91 = vector.broadcast %10 : f32 to vector<8x1xf32>
    %92 = tpu.concatenate %90, %91 in 1 : vector<8x1xf32>, vector<8x1xf32> -> vector<8x2xf32>
    %93 = vector.broadcast %12 : f32 to vector<8x1xf32>
    %94 = vector.broadcast %13 : f32 to vector<8x1xf32>
    %95 = tpu.concatenate %93, %94 in 1 : vector<8x1xf32>, vector<8x1xf32> -> vector<8x2xf32>
    %96 = vector.broadcast %15 : f32 to vector<8x1xf32>
    %97 = vector.broadcast %16 : f32 to vector<8x1xf32>
    %98 = tpu.concatenate %96, %97 in 1 : vector<8x1xf32>, vector<8x1xf32> -> vector<8x2xf32>
    %99 = vector.broadcast %18 : f32 to vector<8x1xf32>
    %100 = vector.broadcast %19 : f32 to vector<8x1xf32>
    %101 = tpu.concatenate %99, %100 in 1 : vector<8x1xf32>, vector<8x1xf32> -> vector<8x2xf32>
    %cst_4 = arith.constant 0.000000e+00 : f32
    %102 = vector.broadcast %cst_4 : f32 to vector<8x1xf32>
    %cst_5 = arith.constant 0.000000e+00 : f32
    %103 = vector.broadcast %cst_5 : f32 to vector<8x1xf32>
    %c8_6 = arith.constant 8 : index
    %c0_7 = arith.constant 0 : index
    %c0_8 = arith.constant 0 : index
    %104 = vector.load %arg2[%c8_6, %c0_7, %c0_8] : memref<9x8x128xf32, #tpu.memory_space<vmem>>, vector<1x8x128xf32>
    %105 = vector.shape_cast %104 : vector<1x8x128xf32> to vector<8x128xf32>
    %106 = vector.extract_strided_slice %81 {offsets = [0, 0], sizes = [8, 2], strides = [1, 1]} : vector<64x2xf32> to vector<8x2xf32>
    %107 = vector.extract_strided_slice %83 {offsets = [0, 0], sizes = [8, 1], strides = [1, 1]} : vector<64x1xf32> to vector<8x1xf32>
    %108 = vector.broadcast %102 : vector<8x1xf32> to vector<8x2xf32>
    %109 = arith.mulf %108, %86 : vector<8x2xf32>
    %110 = arith.addf %106, %109 : vector<8x2xf32>
    %111 = arith.addf %110, %89 : vector<8x2xf32>
    %cst_9 = arith.constant 5.000000e-01 : f32
    %112 = vector.broadcast %cst_9 : f32 to vector<8x2xf32>
    %113 = arith.mulf %112, %111 : vector<8x2xf32>
    %114 = math.tanh %113 : vector<8x2xf32>
    %cst_10 = arith.constant 5.000000e-01 : f32
    %115 = vector.broadcast %cst_10 : f32 to vector<8x2xf32>
    %116 = arith.mulf %115, %114 : vector<8x2xf32>
    %cst_11 = arith.constant 5.000000e-01 : f32
    %117 = vector.broadcast %cst_11 : f32 to vector<8x2xf32>
    %118 = arith.addf %116, %117 : vector<8x2xf32>
    %119 = vector.extract_strided_slice %118 {offsets = [0, 0], sizes = [8, 1], strides = [1, 1]} : vector<8x2xf32> to vector<8x1xf32>
    %120 = vector.extract_strided_slice %118 {offsets = [0, 1], sizes = [8, 1], strides = [1, 1]} : vector<8x2xf32> to vector<8x1xf32>
    %121 = vector.broadcast %5 : f32 to vector<8x1xf32>
    %122 = arith.mulf %102, %121 : vector<8x1xf32>
    %123 = vector.broadcast %8 : f32 to vector<8x1xf32>
    %124 = arith.addf %122, %123 : vector<8x1xf32>
    %125 = arith.mulf %119, %124 : vector<8x1xf32>
    %126 = arith.addf %107, %125 : vector<8x1xf32>
    %127 = math.tanh %126 : vector<8x1xf32>
    %128 = arith.subf %102, %127 : vector<8x1xf32>
    %129 = arith.mulf %120, %128 : vector<8x1xf32>
    %130 = arith.addf %127, %129 : vector<8x1xf32>
    %131 = vector.broadcast %130 : vector<8x1xf32> to vector<8x2xf32>
    %132 = arith.mulf %131, %92 : vector<8x2xf32>
    %133 = arith.addf %132, %95 : vector<8x2xf32>
    %134 = vector.broadcast %103 : vector<8x1xf32> to vector<8x2xf32>
    %135 = arith.mulf %134, %98 : vector<8x2xf32>
    %136 = arith.addf %133, %135 : vector<8x2xf32>
    %137 = arith.addf %136, %101 : vector<8x2xf32>
    %cst_12 = arith.constant 5.000000e-01 : f32
    %138 = vector.broadcast %cst_12 : f32 to vector<8x2xf32>
    %139 = arith.mulf %138, %137 : vector<8x2xf32>
    %140 = math.tanh %139 : vector<8x2xf32>
    %cst_13 = arith.constant 5.000000e-01 : f32
    %141 = vector.broadcast %cst_13 : f32 to vector<8x2xf32>
    %142 = arith.mulf %141, %140 : vector<8x2xf32>
    %cst_14 = arith.constant 5.000000e-01 : f32
    %143 = vector.broadcast %cst_14 : f32 to vector<8x2xf32>
    %144 = arith.addf %142, %143 : vector<8x2xf32>
    %145 = vector.extract_strided_slice %144 {offsets = [0, 0], sizes = [8, 1], strides = [1, 1]} : vector<8x2xf32> to vector<8x1xf32>
    %146 = vector.extract_strided_slice %144 {offsets = [0, 1], sizes = [8, 1], strides = [1, 1]} : vector<8x2xf32> to vector<8x1xf32>
    %147 = vector.broadcast %11 : f32 to vector<8x1xf32>
    %148 = arith.mulf %130, %147 : vector<8x1xf32>
    %149 = vector.broadcast %14 : f32 to vector<8x1xf32>
    %150 = arith.addf %148, %149 : vector<8x1xf32>
    %151 = vector.broadcast %17 : f32 to vector<8x1xf32>
    %152 = arith.mulf %103, %151 : vector<8x1xf32>
    %153 = vector.broadcast %20 : f32 to vector<8x1xf32>
    %154 = arith.addf %152, %153 : vector<8x1xf32>
    %155 = arith.mulf %145, %154 : vector<8x1xf32>
    %156 = arith.addf %150, %155 : vector<8x1xf32>
    %157 = math.tanh %156 : vector<8x1xf32>
    %158 = arith.subf %103, %157 : vector<8x1xf32>
    %159 = arith.mulf %146, %158 : vector<8x1xf32>
    %160 = arith.addf %157, %159 : vector<8x1xf32>
    %c0_15 = arith.constant 0 : index
    %c0_16 = arith.constant 0 : index
    %c0_17 = arith.constant 0 : index
    %161 = vector.load %arg2[%c0_15, %c0_16, %c0_17] : memref<9x8x128xf32, #tpu.memory_space<vmem>>, vector<1x8x128xf32>
    %162 = vector.shape_cast %161 : vector<1x8x128xf32> to vector<8x128xf32>
    %163 = vector.broadcast %160 : vector<8x1xf32> to vector<8x128xf32>
    %164 = arith.mulf %163, %162 : vector<8x128xf32>
    %165 = arith.addf %105, %164 : vector<8x128xf32>
    %166 = vector.extract_strided_slice %81 {offsets = [8, 0], sizes = [8, 2], strides = [1, 1]} : vector<64x2xf32> to vector<8x2xf32>
    %167 = vector.extract_strided_slice %83 {offsets = [8, 0], sizes = [8, 1], strides = [1, 1]} : vector<64x1xf32> to vector<8x1xf32>
    %168 = vector.broadcast %130 : vector<8x1xf32> to vector<8x2xf32>
    %169 = arith.mulf %168, %86 : vector<8x2xf32>
    %170 = arith.addf %166, %169 : vector<8x2xf32>
    %171 = arith.addf %170, %89 : vector<8x2xf32>
    %cst_18 = arith.constant 5.000000e-01 : f32
    %172 = vector.broadcast %cst_18 : f32 to vector<8x2xf32>
    %173 = arith.mulf %172, %171 : vector<8x2xf32>
    %174 = math.tanh %173 : vector<8x2xf32>
    %cst_19 = arith.constant 5.000000e-01 : f32
    %175 = vector.broadcast %cst_19 : f32 to vector<8x2xf32>
    %176 = arith.mulf %175, %174 : vector<8x2xf32>
    %cst_20 = arith.constant 5.000000e-01 : f32
    %177 = vector.broadcast %cst_20 : f32 to vector<8x2xf32>
    %178 = arith.addf %176, %177 : vector<8x2xf32>
    %179 = vector.extract_strided_slice %178 {offsets = [0, 0], sizes = [8, 1], strides = [1, 1]} : vector<8x2xf32> to vector<8x1xf32>
    %180 = vector.extract_strided_slice %178 {offsets = [0, 1], sizes = [8, 1], strides = [1, 1]} : vector<8x2xf32> to vector<8x1xf32>
    %181 = vector.broadcast %5 : f32 to vector<8x1xf32>
    %182 = arith.mulf %130, %181 : vector<8x1xf32>
    %183 = vector.broadcast %8 : f32 to vector<8x1xf32>
    %184 = arith.addf %182, %183 : vector<8x1xf32>
    %185 = arith.mulf %179, %184 : vector<8x1xf32>
    %186 = arith.addf %167, %185 : vector<8x1xf32>
    %187 = math.tanh %186 : vector<8x1xf32>
    %188 = arith.subf %130, %187 : vector<8x1xf32>
    %189 = arith.mulf %180, %188 : vector<8x1xf32>
    %190 = arith.addf %187, %189 : vector<8x1xf32>
    %191 = vector.broadcast %190 : vector<8x1xf32> to vector<8x2xf32>
    %192 = arith.mulf %191, %92 : vector<8x2xf32>
    %193 = arith.addf %192, %95 : vector<8x2xf32>
    %194 = vector.broadcast %160 : vector<8x1xf32> to vector<8x2xf32>
    %195 = arith.mulf %194, %98 : vector<8x2xf32>
    %196 = arith.addf %193, %195 : vector<8x2xf32>
    %197 = arith.addf %196, %101 : vector<8x2xf32>
    %cst_21 = arith.constant 5.000000e-01 : f32
    %198 = vector.broadcast %cst_21 : f32 to vector<8x2xf32>
    %199 = arith.mulf %198, %197 : vector<8x2xf32>
    %200 = math.tanh %199 : vector<8x2xf32>
    %cst_22 = arith.constant 5.000000e-01 : f32
    %201 = vector.broadcast %cst_22 : f32 to vector<8x2xf32>
    %202 = arith.mulf %201, %200 : vector<8x2xf32>
    %cst_23 = arith.constant 5.000000e-01 : f32
    %203 = vector.broadcast %cst_23 : f32 to vector<8x2xf32>
    %204 = arith.addf %202, %203 : vector<8x2xf32>
    %205 = vector.extract_strided_slice %204 {offsets = [0, 0], sizes = [8, 1], strides = [1, 1]} : vector<8x2xf32> to vector<8x1xf32>
    %206 = vector.extract_strided_slice %204 {offsets = [0, 1], sizes = [8, 1], strides = [1, 1]} : vector<8x2xf32> to vector<8x1xf32>
    %207 = vector.broadcast %11 : f32 to vector<8x1xf32>
    %208 = arith.mulf %190, %207 : vector<8x1xf32>
    %209 = vector.broadcast %14 : f32 to vector<8x1xf32>
    %210 = arith.addf %208, %209 : vector<8x1xf32>
    %211 = vector.broadcast %17 : f32 to vector<8x1xf32>
    %212 = arith.mulf %160, %211 : vector<8x1xf32>
    %213 = vector.broadcast %20 : f32 to vector<8x1xf32>
    %214 = arith.addf %212, %213 : vector<8x1xf32>
    %215 = arith.mulf %205, %214 : vector<8x1xf32>
    %216 = arith.addf %210, %215 : vector<8x1xf32>
    %217 = math.tanh %216 : vector<8x1xf32>
    %218 = arith.subf %160, %217 : vector<8x1xf32>
    %219 = arith.mulf %206, %218 : vector<8x1xf32>
    %220 = arith.addf %217, %219 : vector<8x1xf32>
    %c1_24 = arith.constant 1 : index
    %c0_25 = arith.constant 0 : index
    %c0_26 = arith.constant 0 : index
    %221 = vector.load %arg2[%c1_24, %c0_25, %c0_26] : memref<9x8x128xf32, #tpu.memory_space<vmem>>, vector<1x8x128xf32>
    %222 = vector.shape_cast %221 : vector<1x8x128xf32> to vector<8x128xf32>
    %223 = vector.broadcast %220 : vector<8x1xf32> to vector<8x128xf32>
    %224 = arith.mulf %223, %222 : vector<8x128xf32>
    %225 = arith.addf %165, %224 : vector<8x128xf32>
    %226 = vector.extract_strided_slice %81 {offsets = [16, 0], sizes = [8, 2], strides = [1, 1]} : vector<64x2xf32> to vector<8x2xf32>
    %227 = vector.extract_strided_slice %83 {offsets = [16, 0], sizes = [8, 1], strides = [1, 1]} : vector<64x1xf32> to vector<8x1xf32>
    %228 = vector.broadcast %190 : vector<8x1xf32> to vector<8x2xf32>
    %229 = arith.mulf %228, %86 : vector<8x2xf32>
    %230 = arith.addf %226, %229 : vector<8x2xf32>
    %231 = arith.addf %230, %89 : vector<8x2xf32>
    %cst_27 = arith.constant 5.000000e-01 : f32
    %232 = vector.broadcast %cst_27 : f32 to vector<8x2xf32>
    %233 = arith.mulf %232, %231 : vector<8x2xf32>
    %234 = math.tanh %233 : vector<8x2xf32>
    %cst_28 = arith.constant 5.000000e-01 : f32
    %235 = vector.broadcast %cst_28 : f32 to vector<8x2xf32>
    %236 = arith.mulf %235, %234 : vector<8x2xf32>
    %cst_29 = arith.constant 5.000000e-01 : f32
    %237 = vector.broadcast %cst_29 : f32 to vector<8x2xf32>
    %238 = arith.addf %236, %237 : vector<8x2xf32>
    %239 = vector.extract_strided_slice %238 {offsets = [0, 0], sizes = [8, 1], strides = [1, 1]} : vector<8x2xf32> to vector<8x1xf32>
    %240 = vector.extract_strided_slice %238 {offsets = [0, 1], sizes = [8, 1], strides = [1, 1]} : vector<8x2xf32> to vector<8x1xf32>
    %241 = vector.broadcast %5 : f32 to vector<8x1xf32>
    %242 = arith.mulf %190, %241 : vector<8x1xf32>
    %243 = vector.broadcast %8 : f32 to vector<8x1xf32>
    %244 = arith.addf %242, %243 : vector<8x1xf32>
    %245 = arith.mulf %239, %244 : vector<8x1xf32>
    %246 = arith.addf %227, %245 : vector<8x1xf32>
    %247 = math.tanh %246 : vector<8x1xf32>
    %248 = arith.subf %190, %247 : vector<8x1xf32>
    %249 = arith.mulf %240, %248 : vector<8x1xf32>
    %250 = arith.addf %247, %249 : vector<8x1xf32>
    %251 = vector.broadcast %250 : vector<8x1xf32> to vector<8x2xf32>
    %252 = arith.mulf %251, %92 : vector<8x2xf32>
    %253 = arith.addf %252, %95 : vector<8x2xf32>
    %254 = vector.broadcast %220 : vector<8x1xf32> to vector<8x2xf32>
    %255 = arith.mulf %254, %98 : vector<8x2xf32>
    %256 = arith.addf %253, %255 : vector<8x2xf32>
    %257 = arith.addf %256, %101 : vector<8x2xf32>
    %cst_30 = arith.constant 5.000000e-01 : f32
    %258 = vector.broadcast %cst_30 : f32 to vector<8x2xf32>
    %259 = arith.mulf %258, %257 : vector<8x2xf32>
    %260 = math.tanh %259 : vector<8x2xf32>
    %cst_31 = arith.constant 5.000000e-01 : f32
    %261 = vector.broadcast %cst_31 : f32 to vector<8x2xf32>
    %262 = arith.mulf %261, %260 : vector<8x2xf32>
    %cst_32 = arith.constant 5.000000e-01 : f32
    %263 = vector.broadcast %cst_32 : f32 to vector<8x2xf32>
    %264 = arith.addf %262, %263 : vector<8x2xf32>
    %265 = vector.extract_strided_slice %264 {offsets = [0, 0], sizes = [8, 1], strides = [1, 1]} : vector<8x2xf32> to vector<8x1xf32>
    %266 = vector.extract_strided_slice %264 {offsets = [0, 1], sizes = [8, 1], strides = [1, 1]} : vector<8x2xf32> to vector<8x1xf32>
    %267 = vector.broadcast %11 : f32 to vector<8x1xf32>
    %268 = arith.mulf %250, %267 : vector<8x1xf32>
    %269 = vector.broadcast %14 : f32 to vector<8x1xf32>
    %270 = arith.addf %268, %269 : vector<8x1xf32>
    %271 = vector.broadcast %17 : f32 to vector<8x1xf32>
    %272 = arith.mulf %220, %271 : vector<8x1xf32>
    %273 = vector.broadcast %20 : f32 to vector<8x1xf32>
    %274 = arith.addf %272, %273 : vector<8x1xf32>
    %275 = arith.mulf %265, %274 : vector<8x1xf32>
    %276 = arith.addf %270, %275 : vector<8x1xf32>
    %277 = math.tanh %276 : vector<8x1xf32>
    %278 = arith.subf %220, %277 : vector<8x1xf32>
    %279 = arith.mulf %266, %278 : vector<8x1xf32>
    %280 = arith.addf %277, %279 : vector<8x1xf32>
    %c2_33 = arith.constant 2 : index
    %c0_34 = arith.constant 0 : index
    %c0_35 = arith.constant 0 : index
    %281 = vector.load %arg2[%c2_33, %c0_34, %c0_35] : memref<9x8x128xf32, #tpu.memory_space<vmem>>, vector<1x8x128xf32>
    %282 = vector.shape_cast %281 : vector<1x8x128xf32> to vector<8x128xf32>
    %283 = vector.broadcast %280 : vector<8x1xf32> to vector<8x128xf32>
    %284 = arith.mulf %283, %282 : vector<8x128xf32>
    %285 = arith.addf %225, %284 : vector<8x128xf32>
    %286 = vector.extract_strided_slice %81 {offsets = [24, 0], sizes = [8, 2], strides = [1, 1]} : vector<64x2xf32> to vector<8x2xf32>
    %287 = vector.extract_strided_slice %83 {offsets = [24, 0], sizes = [8, 1], strides = [1, 1]} : vector<64x1xf32> to vector<8x1xf32>
    %288 = vector.broadcast %250 : vector<8x1xf32> to vector<8x2xf32>
    %289 = arith.mulf %288, %86 : vector<8x2xf32>
    %290 = arith.addf %286, %289 : vector<8x2xf32>
    %291 = arith.addf %290, %89 : vector<8x2xf32>
    %cst_36 = arith.constant 5.000000e-01 : f32
    %292 = vector.broadcast %cst_36 : f32 to vector<8x2xf32>
    %293 = arith.mulf %292, %291 : vector<8x2xf32>
    %294 = math.tanh %293 : vector<8x2xf32>
    %cst_37 = arith.constant 5.000000e-01 : f32
    %295 = vector.broadcast %cst_37 : f32 to vector<8x2xf32>
    %296 = arith.mulf %295, %294 : vector<8x2xf32>
    %cst_38 = arith.constant 5.000000e-01 : f32
    %297 = vector.broadcast %cst_38 : f32 to vector<8x2xf32>
    %298 = arith.addf %296, %297 : vector<8x2xf32>
    %299 = vector.extract_strided_slice %298 {offsets = [0, 0], sizes = [8, 1], strides = [1, 1]} : vector<8x2xf32> to vector<8x1xf32>
    %300 = vector.extract_strided_slice %298 {offsets = [0, 1], sizes = [8, 1], strides = [1, 1]} : vector<8x2xf32> to vector<8x1xf32>
    %301 = vector.broadcast %5 : f32 to vector<8x1xf32>
    %302 = arith.mulf %250, %301 : vector<8x1xf32>
    %303 = vector.broadcast %8 : f32 to vector<8x1xf32>
    %304 = arith.addf %302, %303 : vector<8x1xf32>
    %305 = arith.mulf %299, %304 : vector<8x1xf32>
    %306 = arith.addf %287, %305 : vector<8x1xf32>
    %307 = math.tanh %306 : vector<8x1xf32>
    %308 = arith.subf %250, %307 : vector<8x1xf32>
    %309 = arith.mulf %300, %308 : vector<8x1xf32>
    %310 = arith.addf %307, %309 : vector<8x1xf32>
    %311 = vector.broadcast %310 : vector<8x1xf32> to vector<8x2xf32>
    %312 = arith.mulf %311, %92 : vector<8x2xf32>
    %313 = arith.addf %312, %95 : vector<8x2xf32>
    %314 = vector.broadcast %280 : vector<8x1xf32> to vector<8x2xf32>
    %315 = arith.mulf %314, %98 : vector<8x2xf32>
    %316 = arith.addf %313, %315 : vector<8x2xf32>
    %317 = arith.addf %316, %101 : vector<8x2xf32>
    %cst_39 = arith.constant 5.000000e-01 : f32
    %318 = vector.broadcast %cst_39 : f32 to vector<8x2xf32>
    %319 = arith.mulf %318, %317 : vector<8x2xf32>
    %320 = math.tanh %319 : vector<8x2xf32>
    %cst_40 = arith.constant 5.000000e-01 : f32
    %321 = vector.broadcast %cst_40 : f32 to vector<8x2xf32>
    %322 = arith.mulf %321, %320 : vector<8x2xf32>
    %cst_41 = arith.constant 5.000000e-01 : f32
    %323 = vector.broadcast %cst_41 : f32 to vector<8x2xf32>
    %324 = arith.addf %322, %323 : vector<8x2xf32>
    %325 = vector.extract_strided_slice %324 {offsets = [0, 0], sizes = [8, 1], strides = [1, 1]} : vector<8x2xf32> to vector<8x1xf32>
    %326 = vector.extract_strided_slice %324 {offsets = [0, 1], sizes = [8, 1], strides = [1, 1]} : vector<8x2xf32> to vector<8x1xf32>
    %327 = vector.broadcast %11 : f32 to vector<8x1xf32>
    %328 = arith.mulf %310, %327 : vector<8x1xf32>
    %329 = vector.broadcast %14 : f32 to vector<8x1xf32>
    %330 = arith.addf %328, %329 : vector<8x1xf32>
    %331 = vector.broadcast %17 : f32 to vector<8x1xf32>
    %332 = arith.mulf %280, %331 : vector<8x1xf32>
    %333 = vector.broadcast %20 : f32 to vector<8x1xf32>
    %334 = arith.addf %332, %333 : vector<8x1xf32>
    %335 = arith.mulf %325, %334 : vector<8x1xf32>
    %336 = arith.addf %330, %335 : vector<8x1xf32>
    %337 = math.tanh %336 : vector<8x1xf32>
    %338 = arith.subf %280, %337 : vector<8x1xf32>
    %339 = arith.mulf %326, %338 : vector<8x1xf32>
    %340 = arith.addf %337, %339 : vector<8x1xf32>
    %c3_42 = arith.constant 3 : index
    %c0_43 = arith.constant 0 : index
    %c0_44 = arith.constant 0 : index
    %341 = vector.load %arg2[%c3_42, %c0_43, %c0_44] : memref<9x8x128xf32, #tpu.memory_space<vmem>>, vector<1x8x128xf32>
    %342 = vector.shape_cast %341 : vector<1x8x128xf32> to vector<8x128xf32>
    %343 = vector.broadcast %340 : vector<8x1xf32> to vector<8x128xf32>
    %344 = arith.mulf %343, %342 : vector<8x128xf32>
    %345 = arith.addf %285, %344 : vector<8x128xf32>
    %346 = vector.extract_strided_slice %81 {offsets = [32, 0], sizes = [8, 2], strides = [1, 1]} : vector<64x2xf32> to vector<8x2xf32>
    %347 = vector.extract_strided_slice %83 {offsets = [32, 0], sizes = [8, 1], strides = [1, 1]} : vector<64x1xf32> to vector<8x1xf32>
    %348 = vector.broadcast %310 : vector<8x1xf32> to vector<8x2xf32>
    %349 = arith.mulf %348, %86 : vector<8x2xf32>
    %350 = arith.addf %346, %349 : vector<8x2xf32>
    %351 = arith.addf %350, %89 : vector<8x2xf32>
    %cst_45 = arith.constant 5.000000e-01 : f32
    %352 = vector.broadcast %cst_45 : f32 to vector<8x2xf32>
    %353 = arith.mulf %352, %351 : vector<8x2xf32>
    %354 = math.tanh %353 : vector<8x2xf32>
    %cst_46 = arith.constant 5.000000e-01 : f32
    %355 = vector.broadcast %cst_46 : f32 to vector<8x2xf32>
    %356 = arith.mulf %355, %354 : vector<8x2xf32>
    %cst_47 = arith.constant 5.000000e-01 : f32
    %357 = vector.broadcast %cst_47 : f32 to vector<8x2xf32>
    %358 = arith.addf %356, %357 : vector<8x2xf32>
    %359 = vector.extract_strided_slice %358 {offsets = [0, 0], sizes = [8, 1], strides = [1, 1]} : vector<8x2xf32> to vector<8x1xf32>
    %360 = vector.extract_strided_slice %358 {offsets = [0, 1], sizes = [8, 1], strides = [1, 1]} : vector<8x2xf32> to vector<8x1xf32>
    %361 = vector.broadcast %5 : f32 to vector<8x1xf32>
    %362 = arith.mulf %310, %361 : vector<8x1xf32>
    %363 = vector.broadcast %8 : f32 to vector<8x1xf32>
    %364 = arith.addf %362, %363 : vector<8x1xf32>
    %365 = arith.mulf %359, %364 : vector<8x1xf32>
    %366 = arith.addf %347, %365 : vector<8x1xf32>
    %367 = math.tanh %366 : vector<8x1xf32>
    %368 = arith.subf %310, %367 : vector<8x1xf32>
    %369 = arith.mulf %360, %368 : vector<8x1xf32>
    %370 = arith.addf %367, %369 : vector<8x1xf32>
    %371 = vector.broadcast %370 : vector<8x1xf32> to vector<8x2xf32>
    %372 = arith.mulf %371, %92 : vector<8x2xf32>
    %373 = arith.addf %372, %95 : vector<8x2xf32>
    %374 = vector.broadcast %340 : vector<8x1xf32> to vector<8x2xf32>
    %375 = arith.mulf %374, %98 : vector<8x2xf32>
    %376 = arith.addf %373, %375 : vector<8x2xf32>
    %377 = arith.addf %376, %101 : vector<8x2xf32>
    %cst_48 = arith.constant 5.000000e-01 : f32
    %378 = vector.broadcast %cst_48 : f32 to vector<8x2xf32>
    %379 = arith.mulf %378, %377 : vector<8x2xf32>
    %380 = math.tanh %379 : vector<8x2xf32>
    %cst_49 = arith.constant 5.000000e-01 : f32
    %381 = vector.broadcast %cst_49 : f32 to vector<8x2xf32>
    %382 = arith.mulf %381, %380 : vector<8x2xf32>
    %cst_50 = arith.constant 5.000000e-01 : f32
    %383 = vector.broadcast %cst_50 : f32 to vector<8x2xf32>
    %384 = arith.addf %382, %383 : vector<8x2xf32>
    %385 = vector.extract_strided_slice %384 {offsets = [0, 0], sizes = [8, 1], strides = [1, 1]} : vector<8x2xf32> to vector<8x1xf32>
    %386 = vector.extract_strided_slice %384 {offsets = [0, 1], sizes = [8, 1], strides = [1, 1]} : vector<8x2xf32> to vector<8x1xf32>
    %387 = vector.broadcast %11 : f32 to vector<8x1xf32>
    %388 = arith.mulf %370, %387 : vector<8x1xf32>
    %389 = vector.broadcast %14 : f32 to vector<8x1xf32>
    %390 = arith.addf %388, %389 : vector<8x1xf32>
    %391 = vector.broadcast %17 : f32 to vector<8x1xf32>
    %392 = arith.mulf %340, %391 : vector<8x1xf32>
    %393 = vector.broadcast %20 : f32 to vector<8x1xf32>
    %394 = arith.addf %392, %393 : vector<8x1xf32>
    %395 = arith.mulf %385, %394 : vector<8x1xf32>
    %396 = arith.addf %390, %395 : vector<8x1xf32>
    %397 = math.tanh %396 : vector<8x1xf32>
    %398 = arith.subf %340, %397 : vector<8x1xf32>
    %399 = arith.mulf %386, %398 : vector<8x1xf32>
    %400 = arith.addf %397, %399 : vector<8x1xf32>
    %c4_51 = arith.constant 4 : index
    %c0_52 = arith.constant 0 : index
    %c0_53 = arith.constant 0 : index
    %401 = vector.load %arg2[%c4_51, %c0_52, %c0_53] : memref<9x8x128xf32, #tpu.memory_space<vmem>>, vector<1x8x128xf32>
    %402 = vector.shape_cast %401 : vector<1x8x128xf32> to vector<8x128xf32>
    %403 = vector.broadcast %400 : vector<8x1xf32> to vector<8x128xf32>
    %404 = arith.mulf %403, %402 : vector<8x128xf32>
    %405 = arith.addf %345, %404 : vector<8x128xf32>
    %406 = vector.extract_strided_slice %81 {offsets = [40, 0], sizes = [8, 2], strides = [1, 1]} : vector<64x2xf32> to vector<8x2xf32>
    %407 = vector.extract_strided_slice %83 {offsets = [40, 0], sizes = [8, 1], strides = [1, 1]} : vector<64x1xf32> to vector<8x1xf32>
    %408 = vector.broadcast %370 : vector<8x1xf32> to vector<8x2xf32>
    %409 = arith.mulf %408, %86 : vector<8x2xf32>
    %410 = arith.addf %406, %409 : vector<8x2xf32>
    %411 = arith.addf %410, %89 : vector<8x2xf32>
    %cst_54 = arith.constant 5.000000e-01 : f32
    %412 = vector.broadcast %cst_54 : f32 to vector<8x2xf32>
    %413 = arith.mulf %412, %411 : vector<8x2xf32>
    %414 = math.tanh %413 : vector<8x2xf32>
    %cst_55 = arith.constant 5.000000e-01 : f32
    %415 = vector.broadcast %cst_55 : f32 to vector<8x2xf32>
    %416 = arith.mulf %415, %414 : vector<8x2xf32>
    %cst_56 = arith.constant 5.000000e-01 : f32
    %417 = vector.broadcast %cst_56 : f32 to vector<8x2xf32>
    %418 = arith.addf %416, %417 : vector<8x2xf32>
    %419 = vector.extract_strided_slice %418 {offsets = [0, 0], sizes = [8, 1], strides = [1, 1]} : vector<8x2xf32> to vector<8x1xf32>
    %420 = vector.extract_strided_slice %418 {offsets = [0, 1], sizes = [8, 1], strides = [1, 1]} : vector<8x2xf32> to vector<8x1xf32>
    %421 = vector.broadcast %5 : f32 to vector<8x1xf32>
    %422 = arith.mulf %370, %421 : vector<8x1xf32>
    %423 = vector.broadcast %8 : f32 to vector<8x1xf32>
    %424 = arith.addf %422, %423 : vector<8x1xf32>
    %425 = arith.mulf %419, %424 : vector<8x1xf32>
    %426 = arith.addf %407, %425 : vector<8x1xf32>
    %427 = math.tanh %426 : vector<8x1xf32>
    %428 = arith.subf %370, %427 : vector<8x1xf32>
    %429 = arith.mulf %420, %428 : vector<8x1xf32>
    %430 = arith.addf %427, %429 : vector<8x1xf32>
    %431 = vector.broadcast %430 : vector<8x1xf32> to vector<8x2xf32>
    %432 = arith.mulf %431, %92 : vector<8x2xf32>
    %433 = arith.addf %432, %95 : vector<8x2xf32>
    %434 = vector.broadcast %400 : vector<8x1xf32> to vector<8x2xf32>
    %435 = arith.mulf %434, %98 : vector<8x2xf32>
    %436 = arith.addf %433, %435 : vector<8x2xf32>
    %437 = arith.addf %436, %101 : vector<8x2xf32>
    %cst_57 = arith.constant 5.000000e-01 : f32
    %438 = vector.broadcast %cst_57 : f32 to vector<8x2xf32>
    %439 = arith.mulf %438, %437 : vector<8x2xf32>
    %440 = math.tanh %439 : vector<8x2xf32>
    %cst_58 = arith.constant 5.000000e-01 : f32
    %441 = vector.broadcast %cst_58 : f32 to vector<8x2xf32>
    %442 = arith.mulf %441, %440 : vector<8x2xf32>
    %cst_59 = arith.constant 5.000000e-01 : f32
    %443 = vector.broadcast %cst_59 : f32 to vector<8x2xf32>
    %444 = arith.addf %442, %443 : vector<8x2xf32>
    %445 = vector.extract_strided_slice %444 {offsets = [0, 0], sizes = [8, 1], strides = [1, 1]} : vector<8x2xf32> to vector<8x1xf32>
    %446 = vector.extract_strided_slice %444 {offsets = [0, 1], sizes = [8, 1], strides = [1, 1]} : vector<8x2xf32> to vector<8x1xf32>
    %447 = vector.broadcast %11 : f32 to vector<8x1xf32>
    %448 = arith.mulf %430, %447 : vector<8x1xf32>
    %449 = vector.broadcast %14 : f32 to vector<8x1xf32>
    %450 = arith.addf %448, %449 : vector<8x1xf32>
    %451 = vector.broadcast %17 : f32 to vector<8x1xf32>
    %452 = arith.mulf %400, %451 : vector<8x1xf32>
    %453 = vector.broadcast %20 : f32 to vector<8x1xf32>
    %454 = arith.addf %452, %453 : vector<8x1xf32>
    %455 = arith.mulf %445, %454 : vector<8x1xf32>
    %456 = arith.addf %450, %455 : vector<8x1xf32>
    %457 = math.tanh %456 : vector<8x1xf32>
    %458 = arith.subf %400, %457 : vector<8x1xf32>
    %459 = arith.mulf %446, %458 : vector<8x1xf32>
    %460 = arith.addf %457, %459 : vector<8x1xf32>
    %c5_60 = arith.constant 5 : index
    %c0_61 = arith.constant 0 : index
    %c0_62 = arith.constant 0 : index
    %461 = vector.load %arg2[%c5_60, %c0_61, %c0_62] : memref<9x8x128xf32, #tpu.memory_space<vmem>>, vector<1x8x128xf32>
    %462 = vector.shape_cast %461 : vector<1x8x128xf32> to vector<8x128xf32>
    %463 = vector.broadcast %460 : vector<8x1xf32> to vector<8x128xf32>
    %464 = arith.mulf %463, %462 : vector<8x128xf32>
    %465 = arith.addf %405, %464 : vector<8x128xf32>
    %466 = vector.extract_strided_slice %81 {offsets = [48, 0], sizes = [8, 2], strides = [1, 1]} : vector<64x2xf32> to vector<8x2xf32>
    %467 = vector.extract_strided_slice %83 {offsets = [48, 0], sizes = [8, 1], strides = [1, 1]} : vector<64x1xf32> to vector<8x1xf32>
    %468 = vector.broadcast %430 : vector<8x1xf32> to vector<8x2xf32>
    %469 = arith.mulf %468, %86 : vector<8x2xf32>
    %470 = arith.addf %466, %469 : vector<8x2xf32>
    %471 = arith.addf %470, %89 : vector<8x2xf32>
    %cst_63 = arith.constant 5.000000e-01 : f32
    %472 = vector.broadcast %cst_63 : f32 to vector<8x2xf32>
    %473 = arith.mulf %472, %471 : vector<8x2xf32>
    %474 = math.tanh %473 : vector<8x2xf32>
    %cst_64 = arith.constant 5.000000e-01 : f32
    %475 = vector.broadcast %cst_64 : f32 to vector<8x2xf32>
    %476 = arith.mulf %475, %474 : vector<8x2xf32>
    %cst_65 = arith.constant 5.000000e-01 : f32
    %477 = vector.broadcast %cst_65 : f32 to vector<8x2xf32>
    %478 = arith.addf %476, %477 : vector<8x2xf32>
    %479 = vector.extract_strided_slice %478 {offsets = [0, 0], sizes = [8, 1], strides = [1, 1]} : vector<8x2xf32> to vector<8x1xf32>
    %480 = vector.extract_strided_slice %478 {offsets = [0, 1], sizes = [8, 1], strides = [1, 1]} : vector<8x2xf32> to vector<8x1xf32>
    %481 = vector.broadcast %5 : f32 to vector<8x1xf32>
    %482 = arith.mulf %430, %481 : vector<8x1xf32>
    %483 = vector.broadcast %8 : f32 to vector<8x1xf32>
    %484 = arith.addf %482, %483 : vector<8x1xf32>
    %485 = arith.mulf %479, %484 : vector<8x1xf32>
    %486 = arith.addf %467, %485 : vector<8x1xf32>
    %487 = math.tanh %486 : vector<8x1xf32>
    %488 = arith.subf %430, %487 : vector<8x1xf32>
    %489 = arith.mulf %480, %488 : vector<8x1xf32>
    %490 = arith.addf %487, %489 : vector<8x1xf32>
    %491 = vector.broadcast %490 : vector<8x1xf32> to vector<8x2xf32>
    %492 = arith.mulf %491, %92 : vector<8x2xf32>
    %493 = arith.addf %492, %95 : vector<8x2xf32>
    %494 = vector.broadcast %460 : vector<8x1xf32> to vector<8x2xf32>
    %495 = arith.mulf %494, %98 : vector<8x2xf32>
    %496 = arith.addf %493, %495 : vector<8x2xf32>
    %497 = arith.addf %496, %101 : vector<8x2xf32>
    %cst_66 = arith.constant 5.000000e-01 : f32
    %498 = vector.broadcast %cst_66 : f32 to vector<8x2xf32>
    %499 = arith.mulf %498, %497 : vector<8x2xf32>
    %500 = math.tanh %499 : vector<8x2xf32>
    %cst_67 = arith.constant 5.000000e-01 : f32
    %501 = vector.broadcast %cst_67 : f32 to vector<8x2xf32>
    %502 = arith.mulf %501, %500 : vector<8x2xf32>
    %cst_68 = arith.constant 5.000000e-01 : f32
    %503 = vector.broadcast %cst_68 : f32 to vector<8x2xf32>
    %504 = arith.addf %502, %503 : vector<8x2xf32>
    %505 = vector.extract_strided_slice %504 {offsets = [0, 0], sizes = [8, 1], strides = [1, 1]} : vector<8x2xf32> to vector<8x1xf32>
    %506 = vector.extract_strided_slice %504 {offsets = [0, 1], sizes = [8, 1], strides = [1, 1]} : vector<8x2xf32> to vector<8x1xf32>
    %507 = vector.broadcast %11 : f32 to vector<8x1xf32>
    %508 = arith.mulf %490, %507 : vector<8x1xf32>
    %509 = vector.broadcast %14 : f32 to vector<8x1xf32>
    %510 = arith.addf %508, %509 : vector<8x1xf32>
    %511 = vector.broadcast %17 : f32 to vector<8x1xf32>
    %512 = arith.mulf %460, %511 : vector<8x1xf32>
    %513 = vector.broadcast %20 : f32 to vector<8x1xf32>
    %514 = arith.addf %512, %513 : vector<8x1xf32>
    %515 = arith.mulf %505, %514 : vector<8x1xf32>
    %516 = arith.addf %510, %515 : vector<8x1xf32>
    %517 = math.tanh %516 : vector<8x1xf32>
    %518 = arith.subf %460, %517 : vector<8x1xf32>
    %519 = arith.mulf %506, %518 : vector<8x1xf32>
    %520 = arith.addf %517, %519 : vector<8x1xf32>
    %c6_69 = arith.constant 6 : index
    %c0_70 = arith.constant 0 : index
    %c0_71 = arith.constant 0 : index
    %521 = vector.load %arg2[%c6_69, %c0_70, %c0_71] : memref<9x8x128xf32, #tpu.memory_space<vmem>>, vector<1x8x128xf32>
    %522 = vector.shape_cast %521 : vector<1x8x128xf32> to vector<8x128xf32>
    %523 = vector.broadcast %520 : vector<8x1xf32> to vector<8x128xf32>
    %524 = arith.mulf %523, %522 : vector<8x128xf32>
    %525 = arith.addf %465, %524 : vector<8x128xf32>
    %526 = vector.extract_strided_slice %81 {offsets = [56, 0], sizes = [8, 2], strides = [1, 1]} : vector<64x2xf32> to vector<8x2xf32>
    %527 = vector.extract_strided_slice %83 {offsets = [56, 0], sizes = [8, 1], strides = [1, 1]} : vector<64x1xf32> to vector<8x1xf32>
    %528 = vector.broadcast %490 : vector<8x1xf32> to vector<8x2xf32>
    %529 = arith.mulf %528, %86 : vector<8x2xf32>
    %530 = arith.addf %526, %529 : vector<8x2xf32>
    %531 = arith.addf %530, %89 : vector<8x2xf32>
    %cst_72 = arith.constant 5.000000e-01 : f32
    %532 = vector.broadcast %cst_72 : f32 to vector<8x2xf32>
    %533 = arith.mulf %532, %531 : vector<8x2xf32>
    %534 = math.tanh %533 : vector<8x2xf32>
    %cst_73 = arith.constant 5.000000e-01 : f32
    %535 = vector.broadcast %cst_73 : f32 to vector<8x2xf32>
    %536 = arith.mulf %535, %534 : vector<8x2xf32>
    %cst_74 = arith.constant 5.000000e-01 : f32
    %537 = vector.broadcast %cst_74 : f32 to vector<8x2xf32>
    %538 = arith.addf %536, %537 : vector<8x2xf32>
    %539 = vector.extract_strided_slice %538 {offsets = [0, 0], sizes = [8, 1], strides = [1, 1]} : vector<8x2xf32> to vector<8x1xf32>
    %540 = vector.extract_strided_slice %538 {offsets = [0, 1], sizes = [8, 1], strides = [1, 1]} : vector<8x2xf32> to vector<8x1xf32>
    %541 = vector.broadcast %5 : f32 to vector<8x1xf32>
    %542 = arith.mulf %490, %541 : vector<8x1xf32>
    %543 = vector.broadcast %8 : f32 to vector<8x1xf32>
    %544 = arith.addf %542, %543 : vector<8x1xf32>
    %545 = arith.mulf %539, %544 : vector<8x1xf32>
    %546 = arith.addf %527, %545 : vector<8x1xf32>
    %547 = math.tanh %546 : vector<8x1xf32>
    %548 = arith.subf %490, %547 : vector<8x1xf32>
    %549 = arith.mulf %540, %548 : vector<8x1xf32>
    %550 = arith.addf %547, %549 : vector<8x1xf32>
    %551 = vector.broadcast %550 : vector<8x1xf32> to vector<8x2xf32>
    %552 = arith.mulf %551, %92 : vector<8x2xf32>
    %553 = arith.addf %552, %95 : vector<8x2xf32>
    %554 = vector.broadcast %520 : vector<8x1xf32> to vector<8x2xf32>
    %555 = arith.mulf %554, %98 : vector<8x2xf32>
    %556 = arith.addf %553, %555 : vector<8x2xf32>
    %557 = arith.addf %556, %101 : vector<8x2xf32>
    %cst_75 = arith.constant 5.000000e-01 : f32
    %558 = vector.broadcast %cst_75 : f32 to vector<8x2xf32>
    %559 = arith.mulf %558, %557 : vector<8x2xf32>
    %560 = math.tanh %559 : vector<8x2xf32>
    %cst_76 = arith.constant 5.000000e-01 : f32
    %561 = vector.broadcast %cst_76 : f32 to vector<8x2xf32>
    %562 = arith.mulf %561, %560 : vector<8x2xf32>
    %cst_77 = arith.constant 5.000000e-01 : f32
    %563 = vector.broadcast %cst_77 : f32 to vector<8x2xf32>
    %564 = arith.addf %562, %563 : vector<8x2xf32>
    %565 = vector.extract_strided_slice %564 {offsets = [0, 0], sizes = [8, 1], strides = [1, 1]} : vector<8x2xf32> to vector<8x1xf32>
    %566 = vector.extract_strided_slice %564 {offsets = [0, 1], sizes = [8, 1], strides = [1, 1]} : vector<8x2xf32> to vector<8x1xf32>
    %567 = vector.broadcast %11 : f32 to vector<8x1xf32>
    %568 = arith.mulf %550, %567 : vector<8x1xf32>
    %569 = vector.broadcast %14 : f32 to vector<8x1xf32>
    %570 = arith.addf %568, %569 : vector<8x1xf32>
    %571 = vector.broadcast %17 : f32 to vector<8x1xf32>
    %572 = arith.mulf %520, %571 : vector<8x1xf32>
    %573 = vector.broadcast %20 : f32 to vector<8x1xf32>
    %574 = arith.addf %572, %573 : vector<8x1xf32>
    %575 = arith.mulf %565, %574 : vector<8x1xf32>
    %576 = arith.addf %570, %575 : vector<8x1xf32>
    %577 = math.tanh %576 : vector<8x1xf32>
    %578 = arith.subf %520, %577 : vector<8x1xf32>
    %579 = arith.mulf %566, %578 : vector<8x1xf32>
    %580 = arith.addf %577, %579 : vector<8x1xf32>
    %c7_78 = arith.constant 7 : index
    %c0_79 = arith.constant 0 : index
    %c0_80 = arith.constant 0 : index
    %581 = vector.load %arg2[%c7_78, %c0_79, %c0_80] : memref<9x8x128xf32, #tpu.memory_space<vmem>>, vector<1x8x128xf32>
    %582 = vector.shape_cast %581 : vector<1x8x128xf32> to vector<8x128xf32>
    %583 = vector.broadcast %580 : vector<8x1xf32> to vector<8x128xf32>
    %584 = arith.mulf %583, %582 : vector<8x128xf32>
    %585 = arith.addf %525, %584 : vector<8x128xf32>
    %cst_81 = arith.constant dense<0.000000e+00> : vector<128xf32>
    %586 = vector.multi_reduction <add>, %585, %cst_81 [0] : vector<8x128xf32> to vector<128xf32>
    %587 = vector.shape_cast %586 : vector<128xf32> to vector<1x128xf32>
    %cst_82 = arith.constant 0.000000e+00 : f32
    %588 = vector.broadcast %cst_82 : f32 to vector<1x128xf32>
    %589 = arith.cmpf oge, %587, %588 : vector<1x128xf32>
    %cst_83 = arith.constant 0.00999999977 : f32
    %590 = vector.broadcast %cst_83 : f32 to vector<1x128xf32>
    %591 = arith.mulf %590, %587 : vector<1x128xf32>
    %592 = arith.select %589, %587, %591 : vector<1x128xi1>, vector<1x128xf32>
    %c0_84 = arith.constant 0 : index
    %c0_85 = arith.constant 0 : index
    %593 = vector.load %arg3[%c0_84, %c0_85] : memref<1x128xf32, #tpu.memory_space<vmem>>, vector<1x128xf32>
    tpu.vector_store %arg3[%c0_84, %c0_85], %592 {strides = array<i32>} : memref<1x128xf32, #tpu.memory_space<vmem>>, vector<1x128xf32>,
    return
  }
}

</mosaic_0001>

<llo_original>
// kernel: gru_nilm_forward.1
$region0: #{gru_nilm_forward.1}
  #allocation0 [shape = 'u32[]', space=smem, size = 0x4, offset = 0x4, fixed_abs, tag = 'smem constant byte address 0x4 - core index']
  #allocation1 [shape = 'u32[144,128]{1,0:T(1,128)}', space=vmem, size = 0x12000, scoped, tag = 'internal scratch']
  %s0 = inlined_call_operand.vmem [shape: f32[64,4], index: 0, kind: input, shape index: {}]
  %s1 = inlined_call_operand.vmem [shape: f32[33], index: 1, kind: input, shape index: {}]
  %s2 = inlined_call_operand.vmem [shape: f32[9,8,128], index: 2, kind: input, shape index: {}]
  %s3 = inlined_call_operand.vmem [shape: f32[1,128], index: 3, kind: output, shape index: {}]
  %s4 = sld [smem:[#allocation0]]
  $region26: #{gru_nilm_forward.1} parent=0
    _
  %s6 = ssub.s32 1, %s4
  %s7 = scalar_select 0, %s6, %s4
  $region1: #{gru_nilm_forward.1} parent=0
    #allocation2 [shape = 'u8[512]{0}', space=smem, size = 0x200, scoped, tag = 'input window, operand 1, single buffered']
    #allocation3 [shape = 's32[1]{0}', space=sflag, size = 0x4, scoped, tag = 'scoped memory for gru_nilm_forward.1']
    %8 = vsyncpa [#allocation3], 0
    // Predicated region
    $region2: #{gru_nilm_forward.1} parent=1 // pred_check
      _
    $region3: #{gru_nilm_forward.1} parent=1 // pred_check_branch
      %10 = sbr.rel (0) target = $region5
    $region4: #{gru_nilm_forward.1} parent=1 // pred_region
      _
    $region5: #{gru_nilm_forward.1} parent=1 // pred_fallthru
      _
    // Predicated region
    $region6: #{gru_nilm_forward.1} parent=1 // pred_check
      _
    $region7: #{gru_nilm_forward.1} parent=1 // pred_check_branch
      %12 = sbr.rel (0) target = $region9
    $region8: #{gru_nilm_forward.1} parent=1 // pred_region
      %s14 = ssub.s32 16, 16
      %15 = vsyncadd [#allocation3], %s14
      %s17 = sshll.u32 %s1, 4
      %s18 = int_to_ptr.vmem [resolvable:$true] %s17
      %20 = dma.vmem_to_smem %s18, 16, [#allocation2], [#allocation3]
    $region9: #{gru_nilm_forward.1} parent=1 // pred_fallthru
      _
    // Predicated region
    $region10: #{gru_nilm_forward.1} parent=1 // pred_check
      _
    $region11: #{gru_nilm_forward.1} parent=1 // pred_check_branch
      %22 = sbr.rel (0) target = $region13
    $region12: #{gru_nilm_forward.1} parent=1 // pred_region
      _
    $region13: #{gru_nilm_forward.1} parent=1 // pred_fallthru
      _
    // Predicated region
    $region14: #{gru_nilm_forward.1} parent=1 // pred_check
      _
    $region15: #{gru_nilm_forward.1} parent=1 // pred_check_branch
      %24 = sbr.rel (0) target = $region17
    $region16: #{gru_nilm_forward.1} parent=1 // pred_region
      %25 = dma.done [#allocation3], 16
    $region17: #{gru_nilm_forward.1} parent=1 // pred_fallthru
      _
    %26 = sfence
    %s27 = sld [smem:[#allocation2 + $0xc]]
    %s28 = sld [smem:[#allocation2 + $0xd]]
    %s29 = sld [smem:[#allocation2 + $0xe]]
    %s30 = sld [smem:[#allocation2 + $0xf]]
    %s31 = sld [smem:[#allocation2 + $0x10]]
    %s32 = sld [smem:[#allocation2 + $0x11]]
    %s33 = sld [smem:[#allocation2 + $0x12]]
    %s34 = sld [smem:[#allocation2 + $0x13]]
    %s35 = sld [smem:[#allocation2 + $0x14]]
    %s36 = sld [smem:[#allocation2 + $0x15]]
    %s37 = sld [smem:[#allocation2 + $0x16]]
    %s38 = sld [smem:[#allocation2 + $0x17]]
    %s39 = sld [smem:[#allocation2 + $0x18]]
    %s40 = sld [smem:[#allocation2 + $0x19]]
    %s41 = sld [smem:[#allocation2 + $0x1a]]
    %s42 = sld [smem:[#allocation2 + $0x1b]]
    %s43 = sld [smem:[#allocation2 + $0x1c]]
    %s44 = sld [smem:[#allocation2 + $0x1d]]
    %s45 = sld [smem:[#allocation2 + $0x1e]]
    %s46 = sld [smem:[#allocation2 + $0x1f]]
    %s47 = sld [smem:[#allocation2 + $0x20]]
    %v48 = vld [vmem:[%s0] sm:$0xff]
    %v49 = vld [vmem:[%s0 + $0x8] sm:$0xff]
    %v50 = vld [vmem:[%s0 + $0x10] sm:$0xff]
    %v51 = vld [vmem:[%s0 + $0x18] sm:$0xff]
    %v52 = vld [vmem:[%s0 + $0x20] sm:$0xff]
    %v53 = vld [vmem:[%s0 + $0x28] sm:$0xff]
    %v54 = vld [vmem:[%s0 + $0x30] sm:$0xff]
    %v55 = vld [vmem:[%s0 + $0x38] sm:$0xff]
    %s56 = sld [smem:[#allocation2]]
    %v57 = vstv %s56
    %v58 = vmul.f32 %v48, %v57
    %v59 = vmul.f32 %v49, %v57
    %v60 = vmul.f32 %v50, %v57
    %v61 = vmul.f32 %v51, %v57
    %v62 = vmul.f32 %v52, %v57
    %v63 = vmul.f32 %v53, %v57
    %v64 = vmul.f32 %v54, %v57
    %v65 = vmul.f32 %v55, %v57
    %v66 = vadd.f32 %v58, 0.0
    %v67 = vadd.f32 %v59, 0.0
    %v68 = vadd.f32 %v60, 0.0
    %v69 = vadd.f32 %v61, 0.0
    %v70 = vadd.f32 %v62, 0.0
    %v71 = vadd.f32 %v63, 0.0
    %v72 = vadd.f32 %v64, 0.0
    %v73 = vadd.f32 %v65, 0.0
    %s74 = sld [smem:[#allocation2 + $0x4]]
    %v75 = vstv %s74
    %v76 = vmul.f32 %v48, %v75
    %v77 = vmul.f32 %v49, %v75
    %v78 = vmul.f32 %v50, %v75
    %v79 = vmul.f32 %v51, %v75
    %v80 = vmul.f32 %v52, %v75
    %v81 = vmul.f32 %v53, %v75
    %v82 = vmul.f32 %v54, %v75
    %v83 = vmul.f32 %v55, %v75
    %v84 = vadd.f32 %v76, 0.0
    %v85 = vadd.f32 %v77, 0.0
    %v86 = vadd.f32 %v78, 0.0
    %v87 = vadd.f32 %v79, 0.0
    %v88 = vadd.f32 %v80, 0.0
    %v89 = vadd.f32 %v81, 0.0
    %v90 = vadd.f32 %v82, 0.0
    %v91 = vadd.f32 %v83, 0.0
    %s92 = sld [smem:[#allocation2 + $0x8]]
    %v93 = vstv %s92
    %v94 = vmul.f32 %v48, %v93
    %v95 = vmul.f32 %v49, %v93
    %v96 = vmul.f32 %v50, %v93
    %v97 = vmul.f32 %v51, %v93
    %v98 = vmul.f32 %v52, %v93
    %v99 = vmul.f32 %v53, %v93
    %v100 = vmul.f32 %v54, %v93
    %v101 = vmul.f32 %v55, %v93
    %v102 = vadd.f32 %v94, 0.0
    %v103 = vadd.f32 %v95, 0.0
    %v104 = vadd.f32 %v96, 0.0
    %v105 = vadd.f32 %v97, 0.0
    %v106 = vadd.f32 %v98, 0.0
    %v107 = vadd.f32 %v99, 0.0
    %v108 = vadd.f32 %v100, 0.0
    %v109 = vadd.f32 %v101, 0.0
    %s110 = sld [smem:[#allocation2 + $0x1]]
    %v111 = vstv %s110
    %v112 = vmul.f32 %v48, %v111
    %v113 = vmul.f32 %v49, %v111
    %v114 = vmul.f32 %v50, %v111
    %v115 = vmul.f32 %v51, %v111
    %v116 = vmul.f32 %v52, %v111
    %v117 = vmul.f32 %v53, %v111
    %v118 = vmul.f32 %v54, %v111
    %v119 = vmul.f32 %v55, %v111
    %128 = vrot.lane.b32.xlu0 %v112, 127
    %v129 = vpop.permute.xlu0 %128
    %130 = vrot.lane.b32.xlu0 %v113, 127
    %v131 = vpop.permute.xlu0 %130
    %132 = vrot.lane.b32.xlu0 %v114, 127
    %v133 = vpop.permute.xlu0 %132
    %134 = vrot.lane.b32.xlu0 %v115, 127
    %v135 = vpop.permute.xlu0 %134
    %136 = vrot.lane.b32.xlu0 %v116, 127
    %v137 = vpop.permute.xlu0 %136
    %138 = vrot.lane.b32.xlu0 %v117, 127
    %v139 = vpop.permute.xlu0 %138
    %140 = vrot.lane.b32.xlu0 %v118, 127
    %v141 = vpop.permute.xlu0 %140
    %142 = vrot.lane.b32.xlu0 %v119, 127
    %v143 = vpop.permute.xlu0 %142
    %v152 = vadd.f32 %v66, %v129
    %v153 = vadd.f32 %v67, %v131
    %v154 = vadd.f32 %v68, %v133
    %v155 = vadd.f32 %v69, %v135
    %v156 = vadd.f32 %v70, %v137
    %v157 = vadd.f32 %v71, %v139
    %v158 = vadd.f32 %v72, %v141
    %v159 = vadd.f32 %v73, %v143
    %s160 = sld [smem:[#allocation2 + $0x5]]
    %v161 = vstv %s160
    %v162 = vmul.f32 %v48, %v161
    %v163 = vmul.f32 %v49, %v161
    %v164 = vmul.f32 %v50, %v161
    %v165 = vmul.f32 %v51, %v161
    %v166 = vmul.f32 %v52, %v161
    %v167 = vmul.f32 %v53, %v161
    %v168 = vmul.f32 %v54, %v161
    %v169 = vmul.f32 %v55, %v161
    %178 = vrot.lane.b32.xlu0 %v162, 127
    %v179 = vpop.permute.xlu0 %178
    %180 = vrot.lane.b32.xlu0 %v163, 127
    %v181 = vpop.permute.xlu0 %180
    %182 = vrot.lane.b32.xlu0 %v164, 127
    %v183 = vpop.permute.xlu0 %182
    %184 = vrot.lane.b32.xlu0 %v165, 127
    %v185 = vpop.permute.xlu0 %184
    %186 = vrot.lane.b32.xlu0 %v166, 127
    %v187 = vpop.permute.xlu0 %186
    %188 = vrot.lane.b32.xlu0 %v167, 127
    %v189 = vpop.permute.xlu0 %188
    %190 = vrot.lane.b32.xlu0 %v168, 127
    %v191 = vpop.permute.xlu0 %190
    %192 = vrot.lane.b32.xlu0 %v169, 127
    %v193 = vpop.permute.xlu0 %192
    %v202 = vadd.f32 %v84, %v179
    %v203 = vadd.f32 %v85, %v181
    %v204 = vadd.f32 %v86, %v183
    %v205 = vadd.f32 %v87, %v185
    %v206 = vadd.f32 %v88, %v187
    %v207 = vadd.f32 %v89, %v189
    %v208 = vadd.f32 %v90, %v191
    %v209 = vadd.f32 %v91, %v193
    %s210 = sld [smem:[#allocation2 + $0x9]]
    %v211 = vstv %s210
    %v212 = vmul.f32 %v48, %v211
    %v213 = vmul.f32 %v49, %v211
    %v214 = vmul.f32 %v50, %v211
    %v215 = vmul.f32 %v51, %v211
    %v216 = vmul.f32 %v52, %v211
    %v217 = vmul.f32 %v53, %v211
    %v218 = vmul.f32 %v54, %v211
    %v219 = vmul.f32 %v55, %v211
    %228 = vrot.lane.b32.xlu0 %v212, 127
    %v229 = vpop.permute.xlu0 %228
    %230 = vrot.lane.b32.xlu0 %v213, 127
    %v231 = vpop.permute.xlu0 %230
    %232 = vrot.lane.b32.xlu0 %v214, 127
    %v233 = vpop.permute.xlu0 %232
    %234 = vrot.lane.b32.xlu0 %v215, 127
    %v235 = vpop.permute.xlu0 %234
    %236 = vrot.lane.b32.xlu0 %v216, 127
    %v237 = vpop.permute.xlu0 %236
    %238 = vrot.lane.b32.xlu0 %v217, 127
    %v239 = vpop.permute.xlu0 %238
    %240 = vrot.lane.b32.xlu0 %v218, 127
    %v241 = vpop.permute.xlu0 %240
    %242 = vrot.lane.b32.xlu0 %v219, 127
    %v243 = vpop.permute.xlu0 %242
    %v252 = vadd.f32 %v102, %v229
    %v253 = vadd.f32 %v103, %v231
    %v254 = vadd.f32 %v104, %v233
    %v255 = vadd.f32 %v105, %v235
    %v256 = vadd.f32 %v106, %v237
    %v257 = vadd.f32 %v107, %v239
    %v258 = vadd.f32 %v108, %v241
    %v259 = vadd.f32 %v109, %v243
    %s260 = sld [smem:[#allocation2 + $0x2]]
    %v261 = vstv %s260
    %v262 = vmul.f32 %v48, %v261
    %v263 = vmul.f32 %v49, %v261
    %v264 = vmul.f32 %v50, %v261
    %v265 = vmul.f32 %v51, %v261
    %v266 = vmul.f32 %v52, %v261
    %v267 = vmul.f32 %v53, %v261
    %v268 = vmul.f32 %v54, %v261
    %v269 = vmul.f32 %v55, %v261
    %278 = vrot.lane.b32.xlu0 %v262, 126
    %v279 = vpop.permute.xlu0 %278
    %280 = vrot.lane.b32.xlu0 %v263, 126
    %v281 = vpop.permute.xlu0 %280
    %282 = vrot.lane.b32.xlu0 %v264, 126
    %v283 = vpop.permute.xlu0 %282
    %284 = vrot.lane.b32.xlu0 %v265, 126
    %v285 = vpop.permute.xlu0 %284
    %286 = vrot.lane.b32.xlu0 %v266, 126
    %v287 = vpop.permute.xlu0 %286
    %288 = vrot.lane.b32.xlu0 %v267, 126
    %v289 = vpop.permute.xlu0 %288
    %290 = vrot.lane.b32.xlu0 %v268, 126
    %v291 = vpop.permute.xlu0 %290
    %292 = vrot.lane.b32.xlu0 %v269, 126
    %v293 = vpop.permute.xlu0 %292
    %v302 = vadd.f32 %v152, %v279
    %v303 = vadd.f32 %v153, %v281
    %v304 = vadd.f32 %v154, %v283
    %v305 = vadd.f32 %v155, %v285
    %v306 = vadd.f32 %v156, %v287
    %v307 = vadd.f32 %v157, %v289
    %v308 = vadd.f32 %v158, %v291
    %v309 = vadd.f32 %v159, %v293
    %s310 = sld [smem:[#allocation2 + $0x6]]
    %v311 = vstv %s310
    %v312 = vmul.f32 %v48, %v311
    %v313 = vmul.f32 %v49, %v311
    %v314 = vmul.f32 %v50, %v311
    %v315 = vmul.f32 %v51, %v311
    %v316 = vmul.f32 %v52, %v311
    %v317 = vmul.f32 %v53, %v311
    %v318 = vmul.f32 %v54, %v311
    %v319 = vmul.f32 %v55, %v311
    %328 = vrot.lane.b32.xlu0 %v312, 126
    %v329 = vpop.permute.xlu0 %328
    %330 = vrot.lane.b32.xlu0 %v313, 126
    %v331 = vpop.permute.xlu0 %330
    %332 = vrot.lane.b32.xlu0 %v314, 126
    %v333 = vpop.permute.xlu0 %332
    %334 = vrot.lane.b32.xlu0 %v315, 126
    %v335 = vpop.permute.xlu0 %334
    %336 = vrot.lane.b32.xlu0 %v316, 126
    %v337 = vpop.permute.xlu0 %336
    %338 = vrot.lane.b32.xlu0 %v317, 126
    %v339 = vpop.permute.xlu0 %338
    %340 = vrot.lane.b32.xlu0 %v318, 126
    %v341 = vpop.permute.xlu0 %340
    %342 = vrot.lane.b32.xlu0 %v319, 126
    %v343 = vpop.permute.xlu0 %342
    %v352 = vadd.f32 %v202, %v329
    %v353 = vadd.f32 %v203, %v331
    %v354 = vadd.f32 %v204, %v333
    %v355 = vadd.f32 %v205, %v335
    %v356 = vadd.f32 %v206, %v337
    %v357 = vadd.f32 %v207, %v339
    %v358 = vadd.f32 %v208, %v341
    %v359 = vadd.f32 %v209, %v343
    %s360 = sld [smem:[#allocation2 + $0xa]]
    %v361 = vstv %s360
    %v362 = vmul.f32 %v48, %v361
    %v363 = vmul.f32 %v49, %v361
    %v364 = vmul.f32 %v50, %v361
    %v365 = vmul.f32 %v51, %v361
    %v366 = vmul.f32 %v52, %v361
    %v367 = vmul.f32 %v53, %v361
    %v368 = vmul.f32 %v54, %v361
    %v369 = vmul.f32 %v55, %v361
    %378 = vrot.lane.b32.xlu0 %v362, 126
    %v379 = vpop.permute.xlu0 %378
    %380 = vrot.lane.b32.xlu0 %v363, 126
    %v381 = vpop.permute.xlu0 %380
    %382 = vrot.lane.b32.xlu0 %v364, 126
    %v383 = vpop.permute.xlu0 %382
    %384 = vrot.lane.b32.xlu0 %v365, 126
    %v385 = vpop.permute.xlu0 %384
    %386 = vrot.lane.b32.xlu0 %v366, 126
    %v387 = vpop.permute.xlu0 %386
    %388 = vrot.lane.b32.xlu0 %v367, 126
    %v389 = vpop.permute.xlu0 %388
    %390 = vrot.lane.b32.xlu0 %v368, 126
    %v391 = vpop.permute.xlu0 %390
    %392 = vrot.lane.b32.xlu0 %v369, 126
    %v393 = vpop.permute.xlu0 %392
    %v402 = vadd.f32 %v252, %v379
    %v403 = vadd.f32 %v253, %v381
    %v404 = vadd.f32 %v254, %v383
    %v405 = vadd.f32 %v255, %v385
    %v406 = vadd.f32 %v256, %v387
    %v407 = vadd.f32 %v257, %v389
    %v408 = vadd.f32 %v258, %v391
    %v409 = vadd.f32 %v259, %v393
    %s410 = sld [smem:[#allocation2 + $0x3]]
    %v411 = vstv %s410
    %v412 = vmul.f32 %v48, %v411
    %v413 = vmul.f32 %v49, %v411
    %v414 = vmul.f32 %v50, %v411
    %v415 = vmul.f32 %v51, %v411
    %v416 = vmul.f32 %v52, %v411
    %v417 = vmul.f32 %v53, %v411
    %v418 = vmul.f32 %v54, %v411
    %v419 = vmul.f32 %v55, %v411
    %428 = vrot.lane.b32.xlu0 %v412, 125
    %v429 = vpop.permute.xlu0 %428
    %430 = vrot.lane.b32.xlu0 %v413, 125
    %v431 = vpop.permute.xlu0 %430
    %432 = vrot.lane.b32.xlu0 %v414, 125
    %v433 = vpop.permute.xlu0 %432
    %434 = vrot.lane.b32.xlu0 %v415, 125
    %v435 = vpop.permute.xlu0 %434
    %436 = vrot.lane.b32.xlu0 %v416, 125
    %v437 = vpop.permute.xlu0 %436
    %438 = vrot.lane.b32.xlu0 %v417, 125
    %v439 = vpop.permute.xlu0 %438
    %440 = vrot.lane.b32.xlu0 %v418, 125
    %v441 = vpop.permute.xlu0 %440
    %442 = vrot.lane.b32.xlu0 %v419, 125
    %v443 = vpop.permute.xlu0 %442
    %v452 = vadd.f32 %v302, %v429
    %v453 = vadd.f32 %v303, %v431
    %v454 = vadd.f32 %v304, %v433
    %v455 = vadd.f32 %v305, %v435
    %v456 = vadd.f32 %v306, %v437
    %v457 = vadd.f32 %v307, %v439
    %v458 = vadd.f32 %v308, %v441
    %v459 = vadd.f32 %v309, %v443
    %s460 = sld [smem:[#allocation2 + $0x7]]
    %v461 = vstv %s460
    %v462 = vmul.f32 %v48, %v461
    %v463 = vmul.f32 %v49, %v461
    %v464 = vmul.f32 %v50, %v461
    %v465 = vmul.f32 %v51, %v461
    %v466 = vmul.f32 %v52, %v461
    %v467 = vmul.f32 %v53, %v461
    %v468 = vmul.f32 %v54, %v461
    %v469 = vmul.f32 %v55, %v461
    %478 = vrot.lane.b32.xlu0 %v462, 125
    %v479 = vpop.permute.xlu0 %478
    %480 = vrot.lane.b32.xlu0 %v463, 125
    %v481 = vpop.permute.xlu0 %480
    %482 = vrot.lane.b32.xlu0 %v464, 125
    %v483 = vpop.permute.xlu0 %482
    %484 = vrot.lane.b32.xlu0 %v465, 125
    %v485 = vpop.permute.xlu0 %484
    %486 = vrot.lane.b32.xlu0 %v466, 125
    %v487 = vpop.permute.xlu0 %486
    %488 = vrot.lane.b32.xlu0 %v467, 125
    %v489 = vpop.permute.xlu0 %488
    %490 = vrot.lane.b32.xlu0 %v468, 125
    %v491 = vpop.permute.xlu0 %490
    %492 = vrot.lane.b32.xlu0 %v469, 125
    %v493 = vpop.permute.xlu0 %492
    %v502 = vadd.f32 %v352, %v479
    %v503 = vadd.f32 %v353, %v481
    %v504 = vadd.f32 %v354, %v483
    %v505 = vadd.f32 %v355, %v485
    %v506 = vadd.f32 %v356, %v487
    %v507 = vadd.f32 %v357, %v489
    %v508 = vadd.f32 %v358, %v491
    %v509 = vadd.f32 %v359, %v493
    %s510 = sld [smem:[#allocation2 + $0xb]]
    %v511 = vstv %s510
    %v512 = vmul.f32 %v48, %v511
    %v513 = vmul.f32 %v49, %v511
    %v514 = vmul.f32 %v50, %v511
    %v515 = vmul.f32 %v51, %v511
    %v516 = vmul.f32 %v52, %v511
    %v517 = vmul.f32 %v53, %v511
    %v518 = vmul.f32 %v54, %v511
    %v519 = vmul.f32 %v55, %v511
    %528 = vrot.lane.b32.xlu0 %v512, 125
    %v529 = vpop.permute.xlu0 %528
    %530 = vrot.lane.b32.xlu0 %v513, 125
    %v531 = vpop.permute.xlu0 %530
    %532 = vrot.lane.b32.xlu0 %v514, 125
    %v533 = vpop.permute.xlu0 %532
    %534 = vrot.lane.b32.xlu0 %v515, 125
    %v535 = vpop.permute.xlu0 %534
    %536 = vrot.lane.b32.xlu0 %v516, 125
    %v537 = vpop.permute.xlu0 %536
    %538 = vrot.lane.b32.xlu0 %v517, 125
    %v539 = vpop.permute.xlu0 %538
    %540 = vrot.lane.b32.xlu0 %v518, 125
    %v541 = vpop.permute.xlu0 %540
    %542 = vrot.lane.b32.xlu0 %v519, 125
    %v543 = vpop.permute.xlu0 %542
    %v552 = vadd.f32 %v402, %v529
    %v553 = vadd.f32 %v403, %v531
    %v554 = vadd.f32 %v404, %v533
    %v555 = vadd.f32 %v405, %v535
    %v556 = vadd.f32 %v406, %v537
    %v557 = vadd.f32 %v407, %v539
    %v558 = vadd.f32 %v408, %v541
    %v559 = vadd.f32 %v409, %v543
    %v560 = vstv %s27
    %v561 = vadd.f32 %v452, %v560
    %v562 = vadd.f32 %v453, %v560
    %v563 = vadd.f32 %v454, %v560
    %v564 = vadd.f32 %v455, %v560
    %v565 = vadd.f32 %v456, %v560
    %v566 = vadd.f32 %v457, %v560
    %v567 = vadd.f32 %v458, %v560
    %v568 = vadd.f32 %v459, %v560
    %v569 = vstv %s28
    %v570 = vadd.f32 %v502, %v569
    %v571 = vadd.f32 %v503, %v569
    %v572 = vadd.f32 %v504, %v569
    %v573 = vadd.f32 %v505, %v569
    %v574 = vadd.f32 %v506, %v569
    %v575 = vadd.f32 %v507, %v569
    %v576 = vadd.f32 %v508, %v569
    %v577 = vadd.f32 %v509, %v569
    %586 = vrot.lane.b32.xlu0 %v570, 1
    %v587 = vpop.permute.xlu0 %586
    %588 = vrot.lane.b32.xlu0 %v571, 1
    %v589 = vpop.permute.xlu0 %588
    %590 = vrot.lane.b32.xlu0 %v572, 1
    %v591 = vpop.permute.xlu0 %590
    %592 = vrot.lane.b32.xlu0 %v573, 1
    %v593 = vpop.permute.xlu0 %592
    %594 = vrot.lane.b32.xlu0 %v574, 1
    %v595 = vpop.permute.xlu0 %594
    %596 = vrot.lane.b32.xlu0 %v575, 1
    %v597 = vpop.permute.xlu0 %596
    %598 = vrot.lane.b32.xlu0 %v576, 1
    %v599 = vpop.permute.xlu0 %598
    %600 = vrot.lane.b32.xlu0 %v577, 1
    %v601 = vpop.permute.xlu0 %600
    %vm610 = vcmask 7168
    %v611 = vsel %vm610, %v561, %v587
    %v612 = vsel %vm610, %v562, %v589
    %v613 = vsel %vm610, %v563, %v591
    %v614 = vsel %vm610, %v564, %v593
    %v615 = vsel %vm610, %v565, %v595
    %v616 = vsel %vm610, %v566, %v597
    %v617 = vsel %vm610, %v567, %v599
    %v618 = vsel %vm610, %v568, %v601
    %v619 = vstv %s29
    %v620 = vadd.f32 %v552, %v619
    %v621 = vadd.f32 %v553, %v619
    %v622 = vadd.f32 %v554, %v619
    %v623 = vadd.f32 %v555, %v619
    %v624 = vadd.f32 %v556, %v619
    %v625 = vadd.f32 %v557, %v619
    %v626 = vadd.f32 %v558, %v619
    %v627 = vadd.f32 %v559, %v619
    %v628 = vstv %s30
    %v629 = vstv %s31
    %v630 = vsel %vm610, %v628, %v629
    %v631 = vstv %s33
    %v632 = vstv %s34
    %v633 = vsel %vm610, %v631, %v632
    %v634 = vstv %s36
    %v635 = vstv %s37
    %v636 = vsel %vm610, %v634, %v635
    %v637 = vstv %s39
    %v638 = vstv %s40
    %v639 = vsel %vm610, %v637, %v638
    %v640 = vstv %s42
    %v641 = vstv %s43
    %v642 = vsel %vm610, %v640, %v641
    %v643 = vstv %s45
    %v644 = vstv %s46
    %v645 = vsel %vm610, %v643, %v644
    %s646 = scalar_lea.vmem %s2, 64
    %v647 = vld [vmem:[%s646] sm:$0xff]
    %v648 = vmul.f32 %v630, 0.0
    %v649 = vadd.f32 %v611, %v648
    %v650 = vadd.f32 %v649, %v633
    %v651 = vmul.f32 %v650, 0.5
    %v652 = vtanh.pop %v651
    %v653 = vmul.f32 %v652, 0.5
    %v654 = vadd.f32 %v653, 0.5
    %v655 = vstv %s32
    %v656 = vmul.f32 %v655, 0.0
    %v657 = vstv %s35
    %v658 = vadd.f32 %v656, %v657
    %v659 = vmul.f32 %v654, %v658
    %v660 = vadd.f32 %v620, %v659
    %v661 = vtanh.pop %v660
    %v662 = vsub.f32 0.0, %v661
    %664 = vrot.lane.b32.xlu0 %v662, 1
    %v665 = vpop.permute.xlu0 %664
    %v667 = vmul.f32 %v654, %v665
    %669 = vrot.lane.b32.xlu0 %v667, 127
    %v670 = vpop.permute.xlu0 %669
    %v672 = vadd.f32 %v661, %v670
    %674 = vset.pattern.permute.xlu0 0
    %675 = vperm.xlu0 %674, %v672
    %v676 = vpop.permute.xlu0 %675
    %v678 = vmul.f32 %v676, %v636
    %v679 = vadd.f32 %v678, %v639
    %v680 = vmul.f32 %v642, 0.0
    %v681 = vadd.f32 %v679, %v680
    %v682 = vadd.f32 %v681, %v645
    %v683 = vmul.f32 %v682, 0.5
    %v684 = vtanh.pop %v683
    %v685 = vmul.f32 %v684, 0.5
    %v686 = vadd.f32 %v685, 0.5
    %v687 = vstv %s38
    %v688 = vmul.f32 %v672, %v687
    %v689 = vstv %s41
    %v690 = vadd.f32 %v688, %v689
    %v691 = vstv %s44
    %v692 = vmul.f32 %v691, 0.0
    %v693 = vstv %s47
    %v694 = vadd.f32 %v692, %v693
    %v695 = vmul.f32 %v686, %v694
    %v696 = vadd.f32 %v690, %v695
    %v697 = vtanh.pop %v696
    %v698 = vsub.f32 0.0, %v697
    %700 = vrot.lane.b32.xlu0 %v698, 1
    %v701 = vpop.permute.xlu0 %700
    %v703 = vmul.f32 %v686, %v701
    %705 = vrot.lane.b32.xlu0 %v703, 127
    %v706 = vpop.permute.xlu0 %705
    %v708 = vadd.f32 %v697, %v706
    %v709 = vld [vmem:[%s2] sm:$0xff]
    %711 = vset.pattern.permute.xlu0 0
    %712 = vperm.xlu0 %711, %v708
    %v713 = vpop.permute.xlu0 %712
    %v715 = vmul.f32 %v713, %v709
    %v716 = vadd.f32 %v647, %v715
    %v717 = vmul.f32 %v676, %v630
    %v718 = vadd.f32 %v612, %v717
    %v719 = vadd.f32 %v718, %v633
    %v720 = vmul.f32 %v719, 0.5
    %v721 = vtanh.pop %v720
    %v722 = vmul.f32 %v721, 0.5
    %v723 = vadd.f32 %v722, 0.5
    %v724 = vmul.f32 %v672, %v655
    %v725 = vadd.f32 %v724, %v657
    %v726 = vmul.f32 %v723, %v725
    %v727 = vadd.f32 %v621, %v726
    %v728 = vtanh.pop %v727
    %v729 = vsub.f32 %v672, %v728
    %731 = vrot.lane.b32.xlu0 %v729, 1
    %v732 = vpop.permute.xlu0 %731
    %v734 = vmul.f32 %v723, %v732
    %736 = vrot.lane.b32.xlu0 %v734, 127
    %v737 = vpop.permute.xlu0 %736
    %v739 = vadd.f32 %v728, %v737
    %741 = vset.pattern.permute.xlu0 0
    %742 = vperm.xlu0 %741, %v739
    %v743 = vpop.permute.xlu0 %742
    %v745 = vmul.f32 %v743, %v636
    %v746 = vadd.f32 %v745, %v639
    %v747 = vmul.f32 %v713, %v642
    %v748 = vadd.f32 %v746, %v747
    %v749 = vadd.f32 %v748, %v645
    %v750 = vmul.f32 %v749, 0.5
    %v751 = vtanh.pop %v750
    %v752 = vmul.f32 %v751, 0.5
    %v753 = vadd.f32 %v752, 0.5
    %v754 = vmul.f32 %v739, %v687
    %v755 = vadd.f32 %v754, %v689
    %v756 = vmul.f32 %v708, %v691
    %v757 = vadd.f32 %v756, %v693
    %v758 = vmul.f32 %v753, %v757
    %v759 = vadd.f32 %v755, %v758
    %v760 = vtanh.pop %v759
    %v761 = vsub.f32 %v708, %v760
    %763 = vrot.lane.b32.xlu0 %v761, 1
    %v764 = vpop.permute.xlu0 %763
    %v766 = vmul.f32 %v753, %v764
    %768 = vrot.lane.b32.xlu0 %v766, 127
    %v769 = vpop.permute.xlu0 %768
    %v771 = vadd.f32 %v760, %v769
    %s772 = scalar_lea.vmem %s2, 8
    %v773 = vld [vmem:[%s772] sm:$0xff]
    %775 = vset.pattern.permute.xlu0 0
    %776 = vperm.xlu0 %775, %v771
    %v777 = vpop.permute.xlu0 %776
    %v779 = vmul.f32 %v777, %v773
    %v780 = vadd.f32 %v716, %v779
    %v781 = vmul.f32 %v743, %v630
    %v782 = vadd.f32 %v613, %v781
    %v783 = vadd.f32 %v782, %v633
    %v784 = vmul.f32 %v783, 0.5
    %v785 = vtanh.pop %v784
    %v786 = vmul.f32 %v785, 0.5
    %v787 = vadd.f32 %v786, 0.5
    %v788 = vmul.f32 %v739, %v655
    %v789 = vadd.f32 %v788, %v657
    %v790 = vmul.f32 %v787, %v789
    %v791 = vadd.f32 %v622, %v790
    %v792 = vtanh.pop %v791
    %v793 = vsub.f32 %v739, %v792
    %795 = vrot.lane.b32.xlu0 %v793, 1
    %v796 = vpop.permute.xlu0 %795
    %v798 = vmul.f32 %v787, %v796
    %800 = vrot.lane.b32.xlu0 %v798, 127
    %v801 = vpop.permute.xlu0 %800
    %v803 = vadd.f32 %v792, %v801
    %805 = vset.pattern.permute.xlu0 0
    %806 = vperm.xlu0 %805, %v803
    %v807 = vpop.permute.xlu0 %806
    %v809 = vmul.f32 %v807, %v636
    %v810 = vadd.f32 %v809, %v639
    %v811 = vmul.f32 %v777, %v642
    %v812 = vadd.f32 %v810, %v811
    %v813 = vadd.f32 %v812, %v645
    %v814 = vmul.f32 %v813, 0.5
    %v815 = vtanh.pop %v814
    %v816 = vmul.f32 %v815, 0.5
    %v817 = vadd.f32 %v816, 0.5
    %v818 = vmul.f32 %v803, %v687
    %v819 = vadd.f32 %v818, %v689
    %v820 = vmul.f32 %v771, %v691
    %v821 = vadd.f32 %v820, %v693
    %v822 = vmul.f32 %v817, %v821
    %v823 = vadd.f32 %v819, %v822
    %v824 = vtanh.pop %v823
    %v825 = vsub.f32 %v771, %v824
    %827 = vrot.lane.b32.xlu0 %v825, 1
    %v828 = vpop.permute.xlu0 %827
    %v830 = vmul.f32 %v817, %v828
    %832 = vrot.lane.b32.xlu0 %v830, 127
    %v833 = vpop.permute.xlu0 %832
    %v835 = vadd.f32 %v824, %v833
    %s836 = scalar_lea.vmem %s2, 16
    %v837 = vld [vmem:[%s836] sm:$0xff]
    %839 = vset.pattern.permute.xlu0 0
    %840 = vperm.xlu0 %839, %v835
    %v841 = vpop.permute.xlu0 %840
    %v843 = vmul.f32 %v841, %v837
    %v844 = vadd.f32 %v780, %v843
    %v845 = vmul.f32 %v807, %v630
    %v846 = vadd.f32 %v614, %v845
    %v847 = vadd.f32 %v846, %v633
    %v848 = vmul.f32 %v847, 0.5
    %v849 = vtanh.pop %v848
    %v850 = vmul.f32 %v849, 0.5
    %v851 = vadd.f32 %v850, 0.5
    %v852 = vmul.f32 %v803, %v655
    %v853 = vadd.f32 %v852, %v657
    %v854 = vmul.f32 %v851, %v853
    %v855 = vadd.f32 %v623, %v854
    %v856 = vtanh.pop %v855
    %v857 = vsub.f32 %v803, %v856
    %859 = vrot.lane.b32.xlu0 %v857, 1
    %v860 = vpop.permute.xlu0 %859
    %v862 = vmul.f32 %v851, %v860
    %864 = vrot.lane.b32.xlu0 %v862, 127
    %v865 = vpop.permute.xlu0 %864
    %v867 = vadd.f32 %v856, %v865
    %869 = vset.pattern.permute.xlu0 0
    %870 = vperm.xlu0 %869, %v867
    %v871 = vpop.permute.xlu0 %870
    %v873 = vmul.f32 %v871, %v636
    %v874 = vadd.f32 %v873, %v639
    %v875 = vmul.f32 %v841, %v642
    %v876 = vadd.f32 %v874, %v875
    %v877 = vadd.f32 %v876, %v645
    %v878 = vmul.f32 %v877, 0.5
    %v879 = vtanh.pop %v878
    %v880 = vmul.f32 %v879, 0.5
    %v881 = vadd.f32 %v880, 0.5
    %v882 = vmul.f32 %v867, %v687
    %v883 = vadd.f32 %v882, %v689
    %v884 = vmul.f32 %v835, %v691
    %v885 = vadd.f32 %v884, %v693
    %v886 = vmul.f32 %v881, %v885
    %v887 = vadd.f32 %v883, %v886
    %v888 = vtanh.pop %v887
    %v889 = vsub.f32 %v835, %v888
    %891 = vrot.lane.b32.xlu0 %v889, 1
    %v892 = vpop.permute.xlu0 %891
    %v894 = vmul.f32 %v881, %v892
    %896 = vrot.lane.b32.xlu0 %v894, 127
    %v897 = vpop.permute.xlu0 %896
    %v899 = vadd.f32 %v888, %v897
    %s900 = scalar_lea.vmem %s2, 24
    %v901 = vld [vmem:[%s900] sm:$0xff]
    %903 = vset.pattern.permute.xlu0 0
    %904 = vperm.xlu0 %903, %v899
    %v905 = vpop.permute.xlu0 %904
    %v907 = vmul.f32 %v905, %v901
    %v908 = vadd.f32 %v844, %v907
    %v909 = vmul.f32 %v871, %v630
    %v910 = vadd.f32 %v615, %v909
    %v911 = vadd.f32 %v910, %v633
    %v912 = vmul.f32 %v911, 0.5
    %v913 = vtanh.pop %v912
    %v914 = vmul.f32 %v913, 0.5
    %v915 = vadd.f32 %v914, 0.5
    %v916 = vmul.f32 %v867, %v655
    %v917 = vadd.f32 %v916, %v657
    %v918 = vmul.f32 %v915, %v917
    %v919 = vadd.f32 %v624, %v918
    %v920 = vtanh.pop %v919
    %v921 = vsub.f32 %v867, %v920
    %923 = vrot.lane.b32.xlu0 %v921, 1
    %v924 = vpop.permute.xlu0 %923
    %v926 = vmul.f32 %v915, %v924
    %928 = vrot.lane.b32.xlu0 %v926, 127
    %v929 = vpop.permute.xlu0 %928
    %v931 = vadd.f32 %v920, %v929
    %933 = vset.pattern.permute.xlu0 0
    %934 = vperm.xlu0 %933, %v931
    %v935 = vpop.permute.xlu0 %934
    %v937 = vmul.f32 %v935, %v636
    %v938 = vadd.f32 %v937, %v639
    %v939 = vmul.f32 %v905, %v642
    %v940 = vadd.f32 %v938, %v939
    %v941 = vadd.f32 %v940, %v645
    %v942 = vmul.f32 %v941, 0.5
    %v943 = vtanh.pop %v942
    %v944 = vmul.f32 %v943, 0.5
    %v945 = vadd.f32 %v944, 0.5
    %v946 = vmul.f32 %v931, %v687
    %v947 = vadd.f32 %v946, %v689
    %v948 = vmul.f32 %v899, %v691
    %v949 = vadd.f32 %v948, %v693
    %v950 = vmul.f32 %v945, %v949
    %v951 = vadd.f32 %v947, %v950
    %v952 = vtanh.pop %v951
    %v953 = vsub.f32 %v899, %v952
    %955 = vrot.lane.b32.xlu0 %v953, 1
    %v956 = vpop.permute.xlu0 %955
    %v958 = vmul.f32 %v945, %v956
    %960 = vrot.lane.b32.xlu0 %v958, 127
    %v961 = vpop.permute.xlu0 %960
    %v963 = vadd.f32 %v952, %v961
    %s964 = scalar_lea.vmem %s2, 32
    %v965 = vld [vmem:[%s964] sm:$0xff]
    %967 = vset.pattern.permute.xlu0 0
    %968 = vperm.xlu0 %967, %v963
    %v969 = vpop.permute.xlu0 %968
    %v971 = vmul.f32 %v969, %v965
    %v972 = vadd.f32 %v908, %v971
    %v973 = vmul.f32 %v935, %v630
    %v974 = vadd.f32 %v616, %v973
    %v975 = vadd.f32 %v974, %v633
    %v976 = vmul.f32 %v975, 0.5
    %v977 = vtanh.pop %v976
    %v978 = vmul.f32 %v977, 0.5
    %v979 = vadd.f32 %v978, 0.5
    %v980 = vmul.f32 %v931, %v655
    %v981 = vadd.f32 %v980, %v657
    %v982 = vmul.f32 %v979, %v981
    %v983 = vadd.f32 %v625, %v982
    %v984 = vtanh.pop %v983
    %v985 = vsub.f32 %v931, %v984
    %987 = vrot.lane.b32.xlu0 %v985, 1
    %v988 = vpop.permute.xlu0 %987
    %v990 = vmul.f32 %v979, %v988
    %992 = vrot.lane.b32.xlu0 %v990, 127
    %v993 = vpop.permute.xlu0 %992
    %v995 = vadd.f32 %v984, %v993
    %997 = vset.pattern.permute.xlu0 0
    %998 = vperm.xlu0 %997, %v995
    %v999 = vpop.permute.xlu0 %998
    %v1001 = vmul.f32 %v999, %v636
    %v1002 = vadd.f32 %v1001, %v639
    %v1003 = vmul.f32 %v969, %v642
    %v1004 = vadd.f32 %v1002, %v1003
    %v1005 = vadd.f32 %v1004, %v645
    %v1006 = vmul.f32 %v1005, 0.5
    %v1007 = vtanh.pop %v1006
    %v1008 = vmul.f32 %v1007, 0.5
    %v1009 = vadd.f32 %v1008, 0.5
    %v1010 = vmul.f32 %v995, %v687
    %v1011 = vadd.f32 %v1010, %v689
    %v1012 = vmul.f32 %v963, %v691
    %v1013 = vadd.f32 %v1012, %v693
    %v1014 = vmul.f32 %v1009, %v1013
    %v1015 = vadd.f32 %v1011, %v1014
    %v1016 = vtanh.pop %v1015
    %v1017 = vsub.f32 %v963, %v1016
    %1019 = vrot.lane.b32.xlu0 %v1017, 1
    %v1020 = vpop.permute.xlu0 %1019
    %v1022 = vmul.f32 %v1009, %v1020
    %1024 = vrot.lane.b32.xlu0 %v1022, 127
    %v1025 = vpop.permute.xlu0 %1024
    %v1027 = vadd.f32 %v1016, %v1025
    %s1028 = scalar_lea.vmem %s2, 40
    %v1029 = vld [vmem:[%s1028] sm:$0xff]
    %1031 = vset.pattern.permute.xlu0 0
    %1032 = vperm.xlu0 %1031, %v1027
    %v1033 = vpop.permute.xlu0 %1032
    %v1035 = vmul.f32 %v1033, %v1029
    %v1036 = vadd.f32 %v972, %v1035
    %v1037 = vmul.f32 %v999, %v630
    %v1038 = vadd.f32 %v617, %v1037
    %v1039 = vadd.f32 %v1038, %v633
    %v1040 = vmul.f32 %v1039, 0.5
    %v1041 = vtanh.pop %v1040
    %v1042 = vmul.f32 %v1041, 0.5
    %v1043 = vadd.f32 %v1042, 0.5
    %v1044 = vmul.f32 %v995, %v655
    %v1045 = vadd.f32 %v1044, %v657
    %v1046 = vmul.f32 %v1043, %v1045
    %v1047 = vadd.f32 %v626, %v1046
    %v1048 = vtanh.pop %v1047
    %v1049 = vsub.f32 %v995, %v1048
    %1051 = vrot.lane.b32.xlu0 %v1049, 1
    %v1052 = vpop.permute.xlu0 %1051
    %v1054 = vmul.f32 %v1043, %v1052
    %1056 = vrot.lane.b32.xlu0 %v1054, 127
    %v1057 = vpop.permute.xlu0 %1056
    %v1059 = vadd.f32 %v1048, %v1057
    %1061 = vset.pattern.permute.xlu0 0
    %1062 = vperm.xlu0 %1061, %v1059
    %v1063 = vpop.permute.xlu0 %1062
    %v1065 = vmul.f32 %v1063, %v636
    %v1066 = vadd.f32 %v1065, %v639
    %v1067 = vmul.f32 %v1033, %v642
    %v1068 = vadd.f32 %v1066, %v1067
    %v1069 = vadd.f32 %v1068, %v645
    %v1070 = vmul.f32 %v1069, 0.5
    %v1071 = vtanh.pop %v1070
    %v1072 = vmul.f32 %v1071, 0.5
    %v1073 = vadd.f32 %v1072, 0.5
    %v1074 = vmul.f32 %v1059, %v687
    %v1075 = vadd.f32 %v1074, %v689
    %v1076 = vmul.f32 %v1027, %v691
    %v1077 = vadd.f32 %v1076, %v693
    %v1078 = vmul.f32 %v1073, %v1077
    %v1079 = vadd.f32 %v1075, %v1078
    %v1080 = vtanh.pop %v1079
    %v1081 = vsub.f32 %v1027, %v1080
    %1083 = vrot.lane.b32.xlu0 %v1081, 1
    %v1084 = vpop.permute.xlu0 %1083
    %v1086 = vmul.f32 %v1073, %v1084
    %1088 = vrot.lane.b32.xlu0 %v1086, 127
    %v1089 = vpop.permute.xlu0 %1088
    %v1091 = vadd.f32 %v1080, %v1089
    %s1092 = scalar_lea.vmem %s2, 48
    %v1093 = vld [vmem:[%s1092] sm:$0xff]
    %1095 = vset.pattern.permute.xlu0 0
    %1096 = vperm.xlu0 %1095, %v1091
    %v1097 = vpop.permute.xlu0 %1096
    %v1099 = vmul.f32 %v1097, %v1093
    %v1100 = vadd.f32 %v1036, %v1099
    %v1101 = vmul.f32 %v1063, %v630
    %v1102 = vadd.f32 %v618, %v1101
    %v1103 = vadd.f32 %v1102, %v633
    %v1104 = vmul.f32 %v1103, 0.5
    %v1105 = vtanh.pop %v1104
    %v1106 = vmul.f32 %v1105, 0.5
    %v1107 = vadd.f32 %v1106, 0.5
    %v1108 = vmul.f32 %v1059, %v655
    %v1109 = vadd.f32 %v1108, %v657
    %v1110 = vmul.f32 %v1107, %v1109
    %v1111 = vadd.f32 %v627, %v1110
    %v1112 = vtanh.pop %v1111
    %v1113 = vsub.f32 %v1059, %v1112
    %1115 = vrot.lane.b32.xlu0 %v1113, 1
    %v1116 = vpop.permute.xlu0 %1115
    %v1118 = vmul.f32 %v1107, %v1116
    %1120 = vrot.lane.b32.xlu0 %v1118, 127
    %v1121 = vpop.permute.xlu0 %1120
    %v1123 = vadd.f32 %v1112, %v1121
    %1125 = vset.pattern.permute.xlu0 0
    %1126 = vperm.xlu0 %1125, %v1123
    %v1127 = vpop.permute.xlu0 %1126
    %v1129 = vmul.f32 %v1127, %v636
    %v1130 = vadd.f32 %v1129, %v639
    %v1131 = vmul.f32 %v1097, %v642
    %v1132 = vadd.f32 %v1130, %v1131
    %v1133 = vadd.f32 %v1132, %v645
    %v1134 = vmul.f32 %v1133, 0.5
    %v1135 = vtanh.pop %v1134
    %v1136 = vmul.f32 %v1135, 0.5
    %v1137 = vadd.f32 %v1136, 0.5
    %v1138 = vmul.f32 %v1123, %v687
    %v1139 = vadd.f32 %v1138, %v689
    %v1140 = vmul.f32 %v1091, %v691
    %v1141 = vadd.f32 %v1140, %v693
    %v1142 = vmul.f32 %v1137, %v1141
    %v1143 = vadd.f32 %v1139, %v1142
    %v1144 = vtanh.pop %v1143
    %v1145 = vsub.f32 %v1091, %v1144
    %1147 = vrot.lane.b32.xlu0 %v1145, 1
    %v1148 = vpop.permute.xlu0 %1147
    %v1150 = vmul.f32 %v1137, %v1148
    %1152 = vrot.lane.b32.xlu0 %v1150, 127
    %v1153 = vpop.permute.xlu0 %1152
    %v1155 = vadd.f32 %v1144, %v1153
    %s1156 = scalar_lea.vmem %s2, 56
    %v1157 = vld [vmem:[%s1156] sm:$0xff]
    %1159 = vset.pattern.permute.xlu0 0
    %1160 = vperm.xlu0 %1159, %v1155
    %v1161 = vpop.permute.xlu0 %1160
    %v1163 = vmul.f32 %v1161, %v1157
    %v1164 = vadd.f32 %v1100, %v1163
    %v1165 = vrot.slane %v1164, 4
    %v1166 = vadd.f32 %v1164, %v1165
    %v1167 = vrot.slane %v1166, 2
    %v1168 = vadd.f32 %v1166, %v1167
    %v1169 = vrot.slane %v1168, 1
    %v1170 = vadd.f32 %v1168, %v1169
    %vm1171 = vcmp.ge.f32.partialorder %v1170, 0.0
    %v1172 = vmul.f32 %v1170, 0.01
    %v1173 = vsel %vm1171, %v1170, %v1172
    %1174 = vst [vmem:[%s3] sm:$0x1] %v1173
    // Predicated region
    $region18: #{gru_nilm_forward.1} parent=1 // pred_check
      _
    $region19: #{gru_nilm_forward.1} parent=1 // pred_check_branch
      %1176 = sbr.rel (0) target = $region21
    $region20: #{gru_nilm_forward.1} parent=1 // pred_region
      _
    $region21: #{gru_nilm_forward.1} parent=1 // pred_fallthru
      _
    // Predicated region
    $region22: #{gru_nilm_forward.1} parent=1 // pred_check
      _
    $region23: #{gru_nilm_forward.1} parent=1 // pred_check_branch
      %1178 = sbr.rel (0) target = $region25
    $region24: #{gru_nilm_forward.1} parent=1 // pred_region
      _
    $region25: #{gru_nilm_forward.1} parent=1 // pred_fallthru
      _
    %1179 = vsyncpa [#allocation3], 1

</llo_original>
